<compile_context>
chip_gen: v7x
topology: tpu7x:2x2x1
jax: 0.10.0
libtpu: 0.0.40
codegen_flags: <defaults>
</compile_context>

<pallas_src>
import functools

import jax
import jax.numpy as jnp
from jax.experimental import pallas as pl
from jax.experimental.pallas import tpu as pltpu


# ----------------------------------------------------------------------------
# Kernel
# ----------------------------------------------------------------------------

def csa_approach1_kernel(x_ref, wT_ref, nb_ref, o_ref, *, K):
    """Fused ConvolutionalSelfAttention (approach '1') for one image.

    x_ref : (1, H, W, C)    input image (channels on lanes)
    wT_ref: (C, KK)         Linear weight transposed, KK = K*K
    nb_ref: (1, KK)         n_global * Linear bias   (pre-folded in the wrapper)
    o_ref : (1, Ho, Wo, C)  output, Ho = H-K+1, Wo = W-K+1
    """
    _, H, W, C = x_ref.shape
    KK = wT_ref.shape[1]
    Ho = H - K + 1
    Wo = W - K + 1

    x = x_ref[0]                                                     # (H, W, C)

    # (1) per-pixel projection on the MXU: ONE matmul instead of K*K tiny ones.
    #     (H, W, C) -> (H*W, C) keeps the lane dim, H multiple of 8 -> layout-preserving.
    x2 = x.reshape(H * W, C)
    t = jnp.dot(x2, wT_ref[...], preferred_element_type=jnp.float32)  # (H*W, KK)

    # (2) projection summed over the whole image, plus n_glob * bias (hoisted to wrapper).
    base = jnp.sum(t, axis=0, keepdims=True) + nb_ref[...]            # (1, KK)

    # (3) separable KxK box filter of the projections -> per-window projection sums.
    t3 = t.reshape(H, W, KK)
    rsum = t3[:, 0:Wo, :]
    for dx in range(1, K):
        rsum = rsum + t3[:, dx:dx + Wo, :]                            # (H, Wo, KK)
    win = rsum[0:Ho, :, :]
    for dy in range(1, K):
        win = win + rsum[dy:dy + Ho, :, :]                            # (Ho, Wo, KK)

    # logits over the K*K taps: contribution of everything OUTSIDE each window.
    logits = base.reshape(1, 1, KK) - win                             # (Ho, Wo, KK)

    # (4) softmax over the taps (lane reduction + EUP exp).
    m = jnp.max(logits, axis=-1, keepdims=True)
    e = jnp.exp(logits - m)
    s = e / jnp.sum(e, axis=-1, keepdims=True)                        # (Ho, Wo, KK)

    # (5) attention-weighted sum of the K*K input taps (VPU, overlaps with nothing heavy).
    acc = None
    for dy in range(K):
        for dx in range(K):
            k = dy * K + dx
            term = s[:, :, k:k + 1] * x[dy:dy + Ho, dx:dx + Wo, :]
            acc = term if acc is None else acc + term
    o_ref[0] = acc.astype(o_ref.dtype)


# ----------------------------------------------------------------------------
# Wrapper
# ----------------------------------------------------------------------------

@functools.partial(jax.jit, static_argnames=("filter_K",))
def conv_self_attention_fwd(x, w_lin, b_lin, *, filter_K):
    """ConvolutionalSelfAttention.forward, approach '1'.

    x      : (B, H, W, C)  channels-last, matching the torch module's input
    w_lin  : (K*K, C)      nn.Linear(C, K*K).weight
    b_lin  : (K*K,)        nn.Linear(C, K*K).bias
    returns: (B, H-K+1, W-K+1, C)
    """
    B, H, W, C = x.shape
    K = filter_K
    KK = K * K
    Ho, Wo = H - K + 1, W - K + 1
    n_glob = H * W - KK                      # number of "global" (outside-window) pixels

    wT = jnp.transpose(w_lin).astype(jnp.float32)                     # (C, KK)
    nb = (float(n_glob) * b_lin).reshape(1, KK).astype(jnp.float32)   # fold bias*count once

    kern = functools.partial(csa_approach1_kernel, K=K)
    return pl.pallas_call(
        kern,
        out_shape=jax.ShapeDtypeStruct((B, Ho, Wo, C), jnp.float32),
        grid_spec=pltpu.PrefetchScalarGridSpec(
            num_scalar_prefetch=0,
            grid=(B,),
            in_specs=[
                pl.BlockSpec((1, H, W, C), lambda b: (b, 0, 0, 0)),   # one image per step
                pl.BlockSpec((C, KK), lambda b: (0, 0)),              # weights stay resident
                pl.BlockSpec((1, KK), lambda b: (0, 0)),
            ],
            out_specs=pl.BlockSpec((1, Ho, Wo, C), lambda b: (b, 0, 0, 0)),
        ),
        compiler_params=pltpu.CompilerParams(
            dimension_semantics=("parallel",)),   # batch axis splits across TCs (v7x)
    )(x.astype(jnp.float32), wT, nb)


# ----------------------------------------------------------------------------
# Pure-JAX reference (same math, validates the Pallas lowering)
# ----------------------------------------------------------------------------

def reference_forward(x, w_lin, b_lin, K):
    B, H, W, C = x.shape
    KK = K * K
    Ho, Wo = H - K + 1, W - K + 1
    n_glob = H * W - KK
    t = jnp.einsum("bhwc,kc->bhwk", x, w_lin)                          # (B,H,W,KK)
    g = jnp.sum(t, axis=(1, 2), keepdims=True)                         # (B,1,1,KK)
    win = jnp.zeros((B, Ho, Wo, KK), jnp.float32)
    for dy in range(K):
        for dx in range(K):
            win = win + t[:, dy:dy + Ho, dx:dx + Wo, :]
    logits = g - win + n_glob * b_lin
    s = jax.nn.softmax(logits, axis=-1)
    out = jnp.zeros((B, Ho, Wo, C), jnp.float32)
    for dy in range(K):
        for dx in range(K):
            k = dy * K + dx
            out = out + s[..., k:k + 1] * x[:, dy:dy + Ho, dx:dx + Wo, :]
    return out


# ----------------------------------------------------------------------------
# Demo
# ----------------------------------------------------------------------------

if __name__ == "__main__":
    key = jax.random.PRNGKey(0)
    k_x, k_w, k_b = jax.random.split(key, 3)

    # spatial_shape = (16, 16, 4), filter_size = 3  -> 14x14 conv grid, 9 taps
    B, H, W, C = 2, 16, 16, 4
    K = 3

    x = jax.random.normal(k_x, (B, H, W, C), jnp.float32)
    bound = 1.0 / (C ** 0.5)                         # nn.Linear default init range
    w_lin = jax.random.uniform(k_w, (K * K, C), jnp.float32, -bound, bound)
    b_lin = jax.random.uniform(k_b, (K * K,), jnp.float32, -bound, bound)

    out = conv_self_attention_fwd(x, w_lin, b_lin, filter_K=K)
    out = jax.block_until_ready(out)

    ref = reference_forward(x, w_lin, b_lin, K)
    assert out.shape == (B, H - K + 1, W - K + 1, C), out.shape
    assert out.dtype == jnp.float32
    assert bool(jnp.all(jnp.isfinite(out)))
    err = float(jnp.max(jnp.abs(out - ref)))
    assert err < 1e-4, f"max abs err vs reference: {err}"

    print("KERNEL_OK")
</pallas_src>

<mosaic_0001>
module attributes {stable_mosaic.version = 11 : i64} {
  func.func @csa_approach1_kernel(%arg0: i32, %arg1: memref<1x16x16x4xf32, #tpu.memory_space<vmem>>, %arg2: memref<4x9xf32, #tpu.memory_space<vmem>>, %arg3: memref<1x9xf32, #tpu.memory_space<vmem>>, %arg4: memref<1x14x14x4xf32, #tpu.memory_space<vmem>>) attributes {dimension_semantics = [#tpu.dimension_semantics<parallel>], iteration_bounds = array<i64: 2>, scalar_prefetch = 0 : i64, scratch_operands = 0 : i64, tpu.core_type = #tpu.core_type<tc>, window_params = [{transform_indices = @transform_0, window_bounds = array<i64: 1, 16, 16, 4>}, {pipeline_mode = #tpu.pipeline_mode<synchronous>, transform_indices = @transform_1, window_bounds = array<i64: 4, 9>}, {pipeline_mode = #tpu.pipeline_mode<synchronous>, transform_indices = @transform_2, window_bounds = array<i64: 1, 9>}, {transform_indices = @transform_3, window_bounds = array<i64: 1, 14, 14, 4>}]} {
    %c0 = arith.constant 0 : index
    %c0_0 = arith.constant 0 : index
    %c0_1 = arith.constant 0 : index
    %c0_2 = arith.constant 0 : index
    %0 = vector.load %arg1[%c0, %c0_0, %c0_1, %c0_2] : memref<1x16x16x4xf32, #tpu.memory_space<vmem>>, vector<1x16x16x4xf32>
    %1 = vector.shape_cast %0 : vector<1x16x16x4xf32> to vector<16x16x4xf32>
    %2 = vector.shape_cast %1 : vector<16x16x4xf32> to vector<256x4xf32>
    %c0_3 = arith.constant 0 : index
    %c0_4 = arith.constant 0 : index
    %3 = vector.load %arg2[%c0_3, %c0_4] : memref<4x9xf32, #tpu.memory_space<vmem>>, vector<4x9xf32>
    %cst = arith.constant dense<0.000000e+00> : vector<256x9xf32>
    %4 = tpu.matmul %2, %3, %cst {dimension_numbers = #tpu.dot_dimension_numbers<[1], [0], [0], [1], [0, 0, 1, 1], [], []>} : vector<256x4xf32>, vector<4x9xf32>, vector<256x9xf32> -> vector<256x9xf32>
    %cst_5 = arith.constant dense<0.000000e+00> : vector<9xf32>
    %5 = vector.multi_reduction <add>, %4, %cst_5 [0] : vector<256x9xf32> to vector<9xf32>
    %6 = vector.shape_cast %5 : vector<9xf32> to vector<1x9xf32>
    %c0_6 = arith.constant 0 : index
    %c0_7 = arith.constant 0 : index
    %7 = vector.load %arg3[%c0_6, %c0_7] : memref<1x9xf32, #tpu.memory_space<vmem>>, vector<1x9xf32>
    %8 = arith.addf %6, %7 : vector<1x9xf32>
    %9 = vector.shape_cast %4 : vector<256x9xf32> to vector<16x16x9xf32>
    %10 = vector.extract_strided_slice %9 {offsets = [0, 0, 0], sizes = [16, 14, 9], strides = [1, 1, 1]} : vector<16x16x9xf32> to vector<16x14x9xf32>
    %11 = vector.extract_strided_slice %9 {offsets = [0, 1, 0], sizes = [16, 14, 9], strides = [1, 1, 1]} : vector<16x16x9xf32> to vector<16x14x9xf32>
    %12 = arith.addf %10, %11 : vector<16x14x9xf32>
    %13 = vector.extract_strided_slice %9 {offsets = [0, 2, 0], sizes = [16, 14, 9], strides = [1, 1, 1]} : vector<16x16x9xf32> to vector<16x14x9xf32>
    %14 = arith.addf %12, %13 : vector<16x14x9xf32>
    %15 = vector.extract_strided_slice %14 {offsets = [0, 0, 0], sizes = [14, 14, 9], strides = [1, 1, 1]} : vector<16x14x9xf32> to vector<14x14x9xf32>
    %16 = vector.extract_strided_slice %14 {offsets = [1, 0, 0], sizes = [14, 14, 9], strides = [1, 1, 1]} : vector<16x14x9xf32> to vector<14x14x9xf32>
    %17 = arith.addf %15, %16 : vector<14x14x9xf32>
    %18 = vector.extract_strided_slice %14 {offsets = [2, 0, 0], sizes = [14, 14, 9], strides = [1, 1, 1]} : vector<16x14x9xf32> to vector<14x14x9xf32>
    %19 = arith.addf %17, %18 : vector<14x14x9xf32>
    %20 = vector.shape_cast %8 : vector<1x9xf32> to vector<1x1x9xf32>
    %21 = vector.broadcast %20 : vector<1x1x9xf32> to vector<14x14x9xf32>
    %22 = arith.subf %21, %19 : vector<14x14x9xf32>
    %cst_8 = arith.constant dense<0xFF800000> : vector<14x14xf32>
    %23 = vector.multi_reduction <maximumf>, %22, %cst_8 [2] : vector<14x14x9xf32> to vector<14x14xf32>
    %24 = vector.shape_cast %23 : vector<14x14xf32> to vector<14x14x1xf32>
    %25 = vector.broadcast %24 : vector<14x14x1xf32> to vector<14x14x9xf32>
    %26 = arith.subf %22, %25 : vector<14x14x9xf32>
    %27 = math.exp %26 : vector<14x14x9xf32>
    %cst_9 = arith.constant dense<0.000000e+00> : vector<14x14xf32>
    %28 = vector.multi_reduction <add>, %27, %cst_9 [2] : vector<14x14x9xf32> to vector<14x14xf32>
    %29 = vector.shape_cast %28 : vector<14x14xf32> to vector<14x14x1xf32>
    %30 = vector.broadcast %29 : vector<14x14x1xf32> to vector<14x14x9xf32>
    %31 = arith.divf %27, %30 : vector<14x14x9xf32>
    %32 = vector.extract_strided_slice %31 {offsets = [0, 0, 0], sizes = [14, 14, 1], strides = [1, 1, 1]} : vector<14x14x9xf32> to vector<14x14x1xf32>
    %33 = vector.extract_strided_slice %1 {offsets = [0, 0, 0], sizes = [14, 14, 4], strides = [1, 1, 1]} : vector<16x16x4xf32> to vector<14x14x4xf32>
    %34 = vector.broadcast %32 : vector<14x14x1xf32> to vector<14x14x4xf32>
    %35 = arith.mulf %34, %33 : vector<14x14x4xf32>
    %36 = vector.extract_strided_slice %31 {offsets = [0, 0, 1], sizes = [14, 14, 1], strides = [1, 1, 1]} : vector<14x14x9xf32> to vector<14x14x1xf32>
    %37 = vector.extract_strided_slice %1 {offsets = [0, 1, 0], sizes = [14, 14, 4], strides = [1, 1, 1]} : vector<16x16x4xf32> to vector<14x14x4xf32>
    %38 = vector.broadcast %36 : vector<14x14x1xf32> to vector<14x14x4xf32>
    %39 = arith.mulf %38, %37 : vector<14x14x4xf32>
    %40 = arith.addf %35, %39 : vector<14x14x4xf32>
    %41 = vector.extract_strided_slice %31 {offsets = [0, 0, 2], sizes = [14, 14, 1], strides = [1, 1, 1]} : vector<14x14x9xf32> to vector<14x14x1xf32>
    %42 = vector.extract_strided_slice %1 {offsets = [0, 2, 0], sizes = [14, 14, 4], strides = [1, 1, 1]} : vector<16x16x4xf32> to vector<14x14x4xf32>
    %43 = vector.broadcast %41 : vector<14x14x1xf32> to vector<14x14x4xf32>
    %44 = arith.mulf %43, %42 : vector<14x14x4xf32>
    %45 = arith.addf %40, %44 : vector<14x14x4xf32>
    %46 = vector.extract_strided_slice %31 {offsets = [0, 0, 3], sizes = [14, 14, 1], strides = [1, 1, 1]} : vector<14x14x9xf32> to vector<14x14x1xf32>
    %47 = vector.extract_strided_slice %1 {offsets = [1, 0, 0], sizes = [14, 14, 4], strides = [1, 1, 1]} : vector<16x16x4xf32> to vector<14x14x4xf32>
    %48 = vector.broadcast %46 : vector<14x14x1xf32> to vector<14x14x4xf32>
    %49 = arith.mulf %48, %47 : vector<14x14x4xf32>
    %50 = arith.addf %45, %49 : vector<14x14x4xf32>
    %51 = vector.extract_strided_slice %31 {offsets = [0, 0, 4], sizes = [14, 14, 1], strides = [1, 1, 1]} : vector<14x14x9xf32> to vector<14x14x1xf32>
    %52 = vector.extract_strided_slice %1 {offsets = [1, 1, 0], sizes = [14, 14, 4], strides = [1, 1, 1]} : vector<16x16x4xf32> to vector<14x14x4xf32>
    %53 = vector.broadcast %51 : vector<14x14x1xf32> to vector<14x14x4xf32>
    %54 = arith.mulf %53, %52 : vector<14x14x4xf32>
    %55 = arith.addf %50, %54 : vector<14x14x4xf32>
    %56 = vector.extract_strided_slice %31 {offsets = [0, 0, 5], sizes = [14, 14, 1], strides = [1, 1, 1]} : vector<14x14x9xf32> to vector<14x14x1xf32>
    %57 = vector.extract_strided_slice %1 {offsets = [1, 2, 0], sizes = [14, 14, 4], strides = [1, 1, 1]} : vector<16x16x4xf32> to vector<14x14x4xf32>
    %58 = vector.broadcast %56 : vector<14x14x1xf32> to vector<14x14x4xf32>
    %59 = arith.mulf %58, %57 : vector<14x14x4xf32>
    %60 = arith.addf %55, %59 : vector<14x14x4xf32>
    %61 = vector.extract_strided_slice %31 {offsets = [0, 0, 6], sizes = [14, 14, 1], strides = [1, 1, 1]} : vector<14x14x9xf32> to vector<14x14x1xf32>
    %62 = vector.extract_strided_slice %1 {offsets = [2, 0, 0], sizes = [14, 14, 4], strides = [1, 1, 1]} : vector<16x16x4xf32> to vector<14x14x4xf32>
    %63 = vector.broadcast %61 : vector<14x14x1xf32> to vector<14x14x4xf32>
    %64 = arith.mulf %63, %62 : vector<14x14x4xf32>
    %65 = arith.addf %60, %64 : vector<14x14x4xf32>
    %66 = vector.extract_strided_slice %31 {offsets = [0, 0, 7], sizes = [14, 14, 1], strides = [1, 1, 1]} : vector<14x14x9xf32> to vector<14x14x1xf32>
    %67 = vector.extract_strided_slice %1 {offsets = [2, 1, 0], sizes = [14, 14, 4], strides = [1, 1, 1]} : vector<16x16x4xf32> to vector<14x14x4xf32>
    %68 = vector.broadcast %66 : vector<14x14x1xf32> to vector<14x14x4xf32>
    %69 = arith.mulf %68, %67 : vector<14x14x4xf32>
    %70 = arith.addf %65, %69 : vector<14x14x4xf32>
    %71 = vector.extract_strided_slice %31 {offsets = [0, 0, 8], sizes = [14, 14, 1], strides = [1, 1, 1]} : vector<14x14x9xf32> to vector<14x14x1xf32>
    %72 = vector.extract_strided_slice %1 {offsets = [2, 2, 0], sizes = [14, 14, 4], strides = [1, 1, 1]} : vector<16x16x4xf32> to vector<14x14x4xf32>
    %73 = vector.broadcast %71 : vector<14x14x1xf32> to vector<14x14x4xf32>
    %74 = arith.mulf %73, %72 : vector<14x14x4xf32>
    %75 = arith.addf %70, %74 : vector<14x14x4xf32>
    %c0_10 = arith.constant 0 : index
    %c0_11 = arith.constant 0 : index
    %c0_12 = arith.constant 0 : index
    %c0_13 = arith.constant 0 : index
    %76 = vector.load %arg4[%c0_10, %c0_11, %c0_12, %c0_13] : memref<1x14x14x4xf32, #tpu.memory_space<vmem>>, vector<1x14x14x4xf32>
    %77 = vector.shape_cast %76 : vector<1x14x14x4xf32> to vector<14x14x4xf32>
    %78 = vector.shape_cast %75 : vector<14x14x4xf32> to vector<1x14x14x4xf32>
    tpu.vector_store %arg4[%c0_10, %c0_11, %c0_12, %c0_13], %78 {strides = array<i32>} : memref<1x14x14x4xf32, #tpu.memory_space<vmem>>, vector<1x14x14x4xf32>,
    return
  }
  func.func @transform_0(%arg0: i32) -> (i32, i32, i32, i32) {
    %c0_i32 = arith.constant 0 : i32
    %c0_i32_0 = arith.constant 0 : i32
    %c0_i32_1 = arith.constant 0 : i32
    %c0_i32_2 = arith.constant 0 : i32
    return %arg0, %c0_i32, %c0_i32_0, %c0_i32_1 : i32, i32, i32, i32
  }
  func.func @transform_1(%arg0: i32) -> (i32, i32) {
    %c0_i32 = arith.constant 0 : i32
    %c0_i32_0 = arith.constant 0 : i32
    %c0_i32_1 = arith.constant 0 : i32
    return %c0_i32, %c0_i32_0 : i32, i32
  }
  func.func @transform_2(%arg0: i32) -> (i32, i32) {
    %c0_i32 = arith.constant 0 : i32
    %c0_i32_0 = arith.constant 0 : i32
    %c0_i32_1 = arith.constant 0 : i32
    return %c0_i32, %c0_i32_0 : i32, i32
  }
  func.func @transform_3(%arg0: i32) -> (i32, i32, i32, i32) {
    %c0_i32 = arith.constant 0 : i32
    %c0_i32_0 = arith.constant 0 : i32
    %c0_i32_1 = arith.constant 0 : i32
    %c0_i32_2 = arith.constant 0 : i32
    return %arg0, %c0_i32, %c0_i32_0, %c0_i32_1 : i32, i32, i32, i32
  }
}

</mosaic_0001>

<llo_original>
// kernel: conv_self_attention_fwd.1
$region0: #{conv_self_attention_fwd.1}
  #allocation0 [shape = 'u32[]', space=smem, size = 0x4, offset = 0x4, fixed_abs, tag = 'smem constant byte address 0x4 - core index']
  #allocation1 [shape = 'u32[144,128]{1,0:T(1,128)}', space=vmem, size = 0x12000, scoped, tag = 'internal scratch']
  %s0 = inlined_call_operand.vmem [shape: f32[2,16,16,4], index: 0, kind: input, shape index: {}]
  %s1 = inlined_call_operand.vmem [shape: f32[4,9], index: 1, kind: input, shape index: {}]
  %s2 = inlined_call_operand.vmem [shape: f32[1,9], index: 2, kind: input, shape index: {}]
  %s3 = inlined_call_operand.vmem [shape: f32[2,14,14,4], index: 3, kind: output, shape index: {}]
  %s4 = sld [smem:[#allocation0]]
  $region45: #{conv_self_attention_fwd.1} parent=0
    _
  %s6 = ssub.s32 1, %s4
  %s7 = scalar_select 0, %s6, %s4
  loop: start=0, step=1, limit=4
  $region2: #{conv_self_attention_fwd.1} parent=0 // loop_pre_header
    _
  $region3: #{conv_self_attention_fwd.1} parent=0 // loop_header
    %s9 = sphi 0, %s13
    %p10 = scmp.ge.s32.totalorder %s9, 4
    %s19 = sphi 0, %s21
    %s22 = sphi 0, %s19
    %s23 = sphi 0, %s22
    %s39 = sphi 0, %s23
    %s43 = sphi 0, %s43
    %s45 = sphi 0, %s43
    %s46 = sphi 0, %s45
    %s60 = sphi 0, %s46
    %s64 = sphi 0, %s64
    %s66 = sphi 0, %s64
    %s67 = sphi 0, %s66
    %s81 = sphi 0, %s67
    %s87 = sphi 0, %s89
    %s90 = sphi 0, %s87
    %s91 = sphi 0, %s90
    %s107 = sphi 0, %s91
  $region4: #{conv_self_attention_fwd.1} parent=0 // loop_header_branch
    %12 = sbr.rel (%p10) target = $region8
  $region5: #{conv_self_attention_fwd.1} parent=0 // loop_body
    %s14 = ssub.s32 %s9, 1
    %s15 = ssub.s32 %s9, 2
    %s16 = sadd.s32 %s9, 1
    %s17 = ssub.s32 %s9, %s16
    %p18 = scmp.eq.s32.totalorder %s17, 0
    %s20 = sadd.s32 %s19, 1
    %s21 = scalar_select %p18, %s19, %s20
    %p24 = pneg %p18
    %p25 = scmp.eq.s32.totalorder %s9, 1
    %p26 = por %p24, %p25
    %p27 = scmp.ne.s32.totalorder %s19, %s22
    %p28 = scmp.eq.s32.totalorder %s9, 0
    %p29 = por %p27, %p28
    %p30 = scmp.ne.s32.totalorder %s19, %s22
    %p31 = scmp.eq.s32.totalorder %s14, 1
    %p32 = por %p30, %p31
    %p33 = scmp.ne.s32.totalorder %s22, %s23
    %p34 = scmp.eq.s32.totalorder %s14, 0
    %p35 = por %p33, %p34
    %p36 = scmp.ne.s32.totalorder %s22, %s23
    %p37 = scmp.eq.s32.totalorder %s15, 1
    %p38 = por %p36, %p37
    %p40 = scmp.ne.s32.totalorder %s23, %s39
    %p41 = scmp.eq.s32.totalorder %s15, 0
    %p42 = por %p40, %p41
    %s44 = sadd.s32 %s43, 1
    %p47 = scmp.eq.s32.totalorder %s9, 1
    %p48 = scmp.ne.s32.totalorder %s43, %s45
    %p49 = scmp.eq.s32.totalorder %s9, 0
    %p50 = por %p48, %p49
    %p51 = scmp.ne.s32.totalorder %s43, %s45
    %p52 = scmp.eq.s32.totalorder %s14, 1
    %p53 = por %p51, %p52
    %p54 = scmp.ne.s32.totalorder %s45, %s46
    %p55 = scmp.eq.s32.totalorder %s14, 0
    %p56 = por %p54, %p55
    %p57 = scmp.ne.s32.totalorder %s45, %s46
    %p58 = scmp.eq.s32.totalorder %s15, 1
    %p59 = por %p57, %p58
    %p61 = scmp.ne.s32.totalorder %s46, %s60
    %p62 = scmp.eq.s32.totalorder %s15, 0
    %p63 = por %p61, %p62
    %s65 = sadd.s32 %s64, 1
    %p68 = scmp.eq.s32.totalorder %s9, 1
    %p69 = scmp.ne.s32.totalorder %s64, %s66
    %p70 = scmp.eq.s32.totalorder %s9, 0
    %p71 = por %p69, %p70
    %p72 = scmp.ne.s32.totalorder %s64, %s66
    %p73 = scmp.eq.s32.totalorder %s14, 1
    %p74 = por %p72, %p73
    %p75 = scmp.ne.s32.totalorder %s66, %s67
    %p76 = scmp.eq.s32.totalorder %s14, 0
    %p77 = por %p75, %p76
    %p78 = scmp.ne.s32.totalorder %s66, %s67
    %p79 = scmp.eq.s32.totalorder %s15, 1
    %p80 = por %p78, %p79
    %p82 = scmp.ne.s32.totalorder %s67, %s81
    %p83 = scmp.eq.s32.totalorder %s15, 0
    %p84 = por %p82, %p83
    %s85 = ssub.s32 %s9, %s16
    %p86 = scmp.eq.s32.totalorder %s85, 0
    %s88 = sadd.s32 %s87, 1
    %s89 = scalar_select %p86, %s87, %s88
    %p92 = pneg %p86
    %p93 = scmp.eq.s32.totalorder %s9, 1
    %p94 = por %p92, %p93
    %p95 = scmp.ne.s32.totalorder %s87, %s90
    %p96 = scmp.eq.s32.totalorder %s9, 0
    %p97 = por %p95, %p96
    %p98 = scmp.ne.s32.totalorder %s87, %s90
    %p99 = scmp.eq.s32.totalorder %s14, 1
    %p100 = por %p98, %p99
    %p101 = scmp.ne.s32.totalorder %s90, %s91
    %p102 = scmp.eq.s32.totalorder %s14, 0
    %p103 = por %p101, %p102
    %p104 = scmp.ne.s32.totalorder %s90, %s91
    %p105 = scmp.eq.s32.totalorder %s15, 1
    %p106 = por %p104, %p105
    %p108 = scmp.ne.s32.totalorder %s91, %s107
    %p109 = scmp.eq.s32.totalorder %s15, 0
    %p110 = por %p108, %p109
    %p111 = scmp.le.s32.totalorder 1, %s9
    %p112 = scmp.lt.s32.totalorder %s9, 3
    %p113 = pnand %p111, %p112
    %p114 = pneg %p113
    // Predicated region
    $region9: #{conv_self_attention_fwd.1} parent=5 // pred_check
      _
    $region10: #{conv_self_attention_fwd.1} parent=5 // pred_check_branch
      %116 = sbr.rel (%p113) target = $region12
    $region11: #{conv_self_attention_fwd.1} parent=5 // pred_region
      %s117 = ssub.s32 %s9, 1
      // Predicated region
      $region13: #{conv_self_attention_fwd.1} parent=11 // pred_check
        %p118 = pneg %p56
      $region14: #{conv_self_attention_fwd.1} parent=11 // pred_check_branch
        %120 = sbr.rel (%p118) target = $region16
      $region15: #{conv_self_attention_fwd.1} parent=11 // pred_region
        _
      $region16: #{conv_self_attention_fwd.1} parent=11 // pred_fallthru
        _
      // Predicated region
      $region17: #{conv_self_attention_fwd.1} parent=11 // pred_check
        %p121 = pneg %p77
      $region18: #{conv_self_attention_fwd.1} parent=11 // pred_check_branch
        %123 = sbr.rel (%p121) target = $region20
      $region19: #{conv_self_attention_fwd.1} parent=11 // pred_region
        _
      $region20: #{conv_self_attention_fwd.1} parent=11 // pred_fallthru
        _
    $region12: #{conv_self_attention_fwd.1} parent=5 // pred_fallthru
      _
    %p124 = scmp.lt.s32.totalorder %s9, 2
    // Predicated region
    $region21: #{conv_self_attention_fwd.1} parent=5 // pred_check
      %p125 = pneg %p124
    $region22: #{conv_self_attention_fwd.1} parent=5 // pred_check_branch
      %127 = sbr.rel (%p125) target = $region24
    $region23: #{conv_self_attention_fwd.1} parent=5 // pred_region
      // Predicated region
      $region25: #{conv_self_attention_fwd.1} parent=23 // pred_check
        %p128 = pneg %p29
      $region26: #{conv_self_attention_fwd.1} parent=23 // pred_check_branch
        %130 = sbr.rel (%p128) target = $region28
      $region27: #{conv_self_attention_fwd.1} parent=23 // pred_region
        %p131 = scmp.lt.s32.totalorder %s9, 1
        %s132 = scalar_select %p131, %s9, 1
        %s133 = smul.addr %s132, 32
        %s134 = smul.addr %s133, 8
        %s135 = scalar_lea.vmem %s0, %s134
      $region28: #{conv_self_attention_fwd.1} parent=23 // pred_fallthru
        _
    $region24: #{conv_self_attention_fwd.1} parent=5 // pred_fallthru
      _
    %p136 = scmp.le.s32.totalorder 1, %s9
    %p137 = scmp.lt.s32.totalorder %s9, 3
    %p138 = pnand %p136, %p137
    %p139 = pneg %p138
    // Predicated region
    $region29: #{conv_self_attention_fwd.1} parent=5 // pred_check
      _
    $region30: #{conv_self_attention_fwd.1} parent=5 // pred_check_branch
      %141 = sbr.rel (%p138) target = $region32
    $region31: #{conv_self_attention_fwd.1} parent=5 // pred_region
      %s142 = ssub.s32 %s9, 1
      %p143 = scmp.lt.s32.totalorder %s14, 1
      %s144 = scalar_select %p143, %s14, 1
      %s145 = smul.addr %s144, 32
      %s146 = smul.addr %s145, 8
      %s147 = scalar_lea.vmem %s0, %s146
      %p148 = pneg %p35
      %p149 = pneg %p32
      %p150 = pneg %p56
      %p151 = pneg %p53
      %p152 = pneg %p77
      %p153 = pneg %p74
      %p154 = pneg %p103
      %p155 = pneg %p100
      %p156 = scmp.lt.s32.totalorder %s14, 1
      %s157 = scalar_select %p156, %s14, 1
      %s158 = smul.addr %s157, 28
      %s159 = smul.addr %s158, 8
      %s160 = scalar_lea.vmem %s3, %s159
      %p161 = scmp.lt.s32.totalorder %s14, 1
      %s162 = scalar_select %p161, %s14, 1
      %s163 = smul.addr %s162, 32
      %s164 = smul.addr %s163, 8
      %s165 = scalar_lea.vmem %s0, %s164
      %p166 = scmp.lt.s32.totalorder %s14, 1
      %s167 = scalar_select %p166, %s14, 1
      %s168 = smul.addr %s167, 28
      %s169 = smul.addr %s168, 8
      %s170 = scalar_lea.vmem %s3, %s169
      %v171 = vld [vmem:[%s165] sm:$0xff]
      %v172 = vld [vmem:[%s165 + $0x8] sm:$0xff]
      %v173 = vld [vmem:[%s165 + $0x10] sm:$0xff]
      %v174 = vld [vmem:[%s165 + $0x18] sm:$0xff]
      %v175 = vld [vmem:[%s165 + $0x20] sm:$0xff]
      %v176 = vld [vmem:[%s165 + $0x28] sm:$0xff]
      %v177 = vld [vmem:[%s165 + $0x30] sm:$0xff]
      %v178 = vld [vmem:[%s165 + $0x38] sm:$0xff]
      %v179 = vld [vmem:[%s165 + $0x40] sm:$0xff]
      %v180 = vld [vmem:[%s165 + $0x48] sm:$0xff]
      %v181 = vld [vmem:[%s165 + $0x50] sm:$0xff]
      %v182 = vld [vmem:[%s165 + $0x58] sm:$0xff]
      %v183 = vld [vmem:[%s165 + $0x60] sm:$0xff]
      %v184 = vld [vmem:[%s165 + $0x68] sm:$0xff]
      %v185 = vld [vmem:[%s165 + $0x70] sm:$0xff]
      %v186 = vld [vmem:[%s165 + $0x78] sm:$0xff]
      %v187 = vld [vmem:[%s165 + $0x80] sm:$0xff]
      %v188 = vld [vmem:[%s165 + $0x88] sm:$0xff]
      %v189 = vld [vmem:[%s165 + $0x90] sm:$0xff]
      %v190 = vld [vmem:[%s165 + $0x98] sm:$0xff]
      %v191 = vld [vmem:[%s165 + $0xa0] sm:$0xff]
      %v192 = vld [vmem:[%s165 + $0xa8] sm:$0xff]
      %v193 = vld [vmem:[%s165 + $0xb0] sm:$0xff]
      %v194 = vld [vmem:[%s165 + $0xb8] sm:$0xff]
      %v195 = vld [vmem:[%s165 + $0xc0] sm:$0xff]
      %v196 = vld [vmem:[%s165 + $0xc8] sm:$0xff]
      %v197 = vld [vmem:[%s165 + $0xd0] sm:$0xff]
      %v198 = vld [vmem:[%s165 + $0xd8] sm:$0xff]
      %v199 = vld [vmem:[%s165 + $0xe0] sm:$0xff]
      %v200 = vld [vmem:[%s165 + $0xe8] sm:$0xff]
      %v201 = vld [vmem:[%s165 + $0xf0] sm:$0xff]
      %v202 = vld [vmem:[%s165 + $0xf8] sm:$0xff]
      %v203 = vld [vmem:[%s1] sm:$0xf]
      %vm204 = vcmask 31744
      %v206 = vsel %vm204, %v171, 0
      %v209 = vsel %vm204, %v172, 0
      %v212 = vsel %vm204, %v173, 0
      %v215 = vsel %vm204, %v174, 0
      %v218 = vsel %vm204, %v175, 0
      %v221 = vsel %vm204, %v176, 0
      %v224 = vsel %vm204, %v177, 0
      %v227 = vsel %vm204, %v178, 0
      %v230 = vsel %vm204, %v179, 0
      %v233 = vsel %vm204, %v180, 0
      %v236 = vsel %vm204, %v181, 0
      %v239 = vsel %vm204, %v182, 0
      %v242 = vsel %vm204, %v183, 0
      %v245 = vsel %vm204, %v184, 0
      %v248 = vsel %vm204, %v185, 0
      %v251 = vsel %vm204, %v186, 0
      %v254 = vsel %vm204, %v187, 0
      %v257 = vsel %vm204, %v188, 0
      %v260 = vsel %vm204, %v189, 0
      %v263 = vsel %vm204, %v190, 0
      %v266 = vsel %vm204, %v191, 0
      %v269 = vsel %vm204, %v192, 0
      %v272 = vsel %vm204, %v193, 0
      %v275 = vsel %vm204, %v194, 0
      %v278 = vsel %vm204, %v195, 0
      %v281 = vsel %vm204, %v196, 0
      %v284 = vsel %vm204, %v197, 0
      %v287 = vsel %vm204, %v198, 0
      %v290 = vsel %vm204, %v199, 0
      %v293 = vsel %vm204, %v200, 0
      %v296 = vsel %vm204, %v201, 0
      %v299 = vsel %vm204, %v202, 0
      %vm301 = vcmask 1043456
      %v303 = vsel %vm301, %v203, 0
      %305 = vmatprep.subr.mxu0 0.0
      %306 = vmatpush1.msra.mxu0 %v303
      %307 = vmatprep.subr.mxu0 0.0
      %308 = vmatpush1.msra.mxu0 0.0
      %309 = vmatprep.subr.mxu0 0.0
      %310 = vmatpush1.msra.mxu0 0.0
      %311 = vmatprep.subr.mxu0 0.0
      %312 = vmatpush1.msra.mxu0 0.0
      %313 = vmatprep.subr.mxu0 0.0
      %314 = vmatpush1.msra.mxu0 0.0
      %315 = vmatprep.subr.mxu0 0.0
      %316 = vmatpush1.msra.mxu0 0.0
      %317 = vmatprep.subr.mxu0 0.0
      %318 = vmatpush1.msra.mxu0 0.0
      %319 = vmatprep.subr.mxu0 0.0
      %320 = vmatpush1.msra.mxu0 0.0
      %321 = vmatprep.subr.mxu0 0.0
      %322 = vmatpush1.msra.mxu0 0.0
      %323 = vmatprep.subr.mxu0 0.0
      %324 = vmatpush1.msra.mxu0 0.0
      %325 = vmatprep.subr.mxu0 0.0
      %326 = vmatpush1.msra.mxu0 0.0
      %327 = vmatprep.subr.mxu0 0.0
      %328 = vmatpush1.msra.mxu0 0.0
      %329 = vmatprep.subr.mxu0 0.0
      %330 = vmatpush1.msra.mxu0 0.0
      %331 = vmatprep.subr.mxu0 0.0
      %332 = vmatpush1.msra.mxu0 0.0
      %333 = vmatprep.subr.mxu0 0.0
      %334 = vmatpush1.msra.mxu0 0.0
      %335 = vmatprep.subr.mxu0 0.0
      %336 = vmatpush1.msra.mxu0 0.0
      %337 = vmatprep.subr.mxu0 0.0
      %338 = vmatpush1.msra.mxu0 0.0
      %339 = vmatprep.subr.mxu0 0.0
      %340 = vmatpush1.msra.mxu0 0.0
      %341 = vmatprep.subr.mxu0 0.0
      %342 = vmatpush1.msra.mxu0 0.0
      %343 = vmatprep.subr.mxu0 0.0
      %344 = vmatpush1.msra.mxu0 0.0
      %345 = vmatprep.subr.mxu0 0.0
      %346 = vmatpush1.msra.mxu0 0.0
      %347 = vmatprep.subr.mxu0 0.0
      %348 = vmatpush1.msra.mxu0 0.0
      %349 = vmatprep.subr.mxu0 0.0
      %350 = vmatpush1.msra.mxu0 0.0
      %351 = vmatprep.subr.mxu0 0.0
      %352 = vmatpush1.msra.mxu0 0.0
      %353 = vmatprep.subr.mxu0 0.0
      %354 = vmatpush1.msra.mxu0 0.0
      %355 = vmatprep.subr.mxu0 0.0
      %356 = vmatpush1.msra.mxu0 0.0
      %357 = vmatprep.subr.mxu0 0.0
      %358 = vmatpush1.msra.mxu0 0.0
      %359 = vmatprep.subr.mxu0 0.0
      %360 = vmatpush1.msra.mxu0 0.0
      %361 = vmatprep.subr.mxu0 0.0
      %362 = vmatpush1.msra.mxu0 0.0
      %363 = vmatprep.subr.mxu0 0.0
      %364 = vmatpush1.msra.mxu0 0.0
      %365 = vmatprep.subr.mxu0 0.0
      %366 = vmatpush1.msra.mxu0 0.0
      %367 = vmatprep.subr.mxu0 0.0
      %368 = vmatpush1.msra.mxu0 0.0
      %369 = vmatprep.mubr.f32.mxu0 0.0
      %370 = vmatmul.mubr.f32.gmra.mrb[0].mxu0 %v206
      %v371 = vpop.f32.mrb[0].mxu0
      %v372 = vadd.f32 0.0, %v371
      %v373 = vpop.f32.mrb[0].mxu0
      %374 = vmatprep.mubr.f32.mxu0 0.0
      %375 = vmatmul.mubr.f32.gmra.mrb[0].mxu0 %v209
      %v376 = vpop.f32.mrb[0].mxu0
      %v377 = vadd.f32 0.0, %v376
      %v378 = vpop.f32.mrb[0].mxu0
      %379 = vmatprep.mubr.f32.mxu0 0.0
      %380 = vmatmul.mubr.f32.gmra.mrb[0].mxu0 %v212
      %v381 = vpop.f32.mrb[0].mxu0
      %v382 = vadd.f32 0.0, %v381
      %v383 = vpop.f32.mrb[0].mxu0
      %384 = vmatprep.mubr.f32.mxu0 0.0
      %385 = vmatmul.mubr.f32.gmra.mrb[0].mxu0 %v215
      %v386 = vpop.f32.mrb[0].mxu0
      %v387 = vadd.f32 0.0, %v386
      %v388 = vpop.f32.mrb[0].mxu0
      %389 = vmatprep.mubr.f32.mxu0 0.0
      %390 = vmatmul.mubr.f32.gmra.mrb[0].mxu0 %v218
      %v391 = vpop.f32.mrb[0].mxu0
      %v392 = vadd.f32 0.0, %v391
      %v393 = vpop.f32.mrb[0].mxu0
      %394 = vmatprep.mubr.f32.mxu0 0.0
      %395 = vmatmul.mubr.f32.gmra.mrb[0].mxu0 %v221
      %v396 = vpop.f32.mrb[0].mxu0
      %v397 = vadd.f32 0.0, %v396
      %v398 = vpop.f32.mrb[0].mxu0
      %399 = vmatprep.mubr.f32.mxu0 0.0
      %400 = vmatmul.mubr.f32.gmra.mrb[0].mxu0 %v224
      %v401 = vpop.f32.mrb[0].mxu0
      %v402 = vadd.f32 0.0, %v401
      %v403 = vpop.f32.mrb[0].mxu0
      %404 = vmatprep.mubr.f32.mxu0 0.0
      %405 = vmatmul.mubr.f32.gmra.mrb[0].mxu0 %v227
      %v406 = vpop.f32.mrb[0].mxu0
      %v407 = vadd.f32 0.0, %v406
      %v408 = vpop.f32.mrb[0].mxu0
      %409 = vmatprep.mubr.f32.mxu0 0.0
      %410 = vmatmul.mubr.f32.gmra.mrb[0].mxu0 %v230
      %v411 = vpop.f32.mrb[0].mxu0
      %v412 = vadd.f32 0.0, %v411
      %v413 = vpop.f32.mrb[0].mxu0
      %414 = vmatprep.mubr.f32.mxu0 0.0
      %415 = vmatmul.mubr.f32.gmra.mrb[0].mxu0 %v233
      %v416 = vpop.f32.mrb[0].mxu0
      %v417 = vadd.f32 0.0, %v416
      %v418 = vpop.f32.mrb[0].mxu0
      %419 = vmatprep.mubr.f32.mxu0 0.0
      %420 = vmatmul.mubr.f32.gmra.mrb[0].mxu0 %v236
      %v421 = vpop.f32.mrb[0].mxu0
      %v422 = vadd.f32 0.0, %v421
      %v423 = vpop.f32.mrb[0].mxu0
      %424 = vmatprep.mubr.f32.mxu0 0.0
      %425 = vmatmul.mubr.f32.gmra.mrb[0].mxu0 %v239
      %v426 = vpop.f32.mrb[0].mxu0
      %v427 = vadd.f32 0.0, %v426
      %v428 = vpop.f32.mrb[0].mxu0
      %429 = vmatprep.mubr.f32.mxu0 0.0
      %430 = vmatmul.mubr.f32.gmra.mrb[0].mxu0 %v242
      %v431 = vpop.f32.mrb[0].mxu0
      %v432 = vadd.f32 0.0, %v431
      %v433 = vpop.f32.mrb[0].mxu0
      %434 = vmatprep.mubr.f32.mxu0 0.0
      %435 = vmatmul.mubr.f32.gmra.mrb[0].mxu0 %v245
      %v436 = vpop.f32.mrb[0].mxu0
      %v437 = vadd.f32 0.0, %v436
      %v438 = vpop.f32.mrb[0].mxu0
      %439 = vmatprep.mubr.f32.mxu0 0.0
      %440 = vmatmul.mubr.f32.gmra.mrb[0].mxu0 %v248
      %v441 = vpop.f32.mrb[0].mxu0
      %v442 = vadd.f32 0.0, %v441
      %v443 = vpop.f32.mrb[0].mxu0
      %444 = vmatprep.mubr.f32.mxu0 0.0
      %445 = vmatmul.mubr.f32.gmra.mrb[0].mxu0 %v251
      %v446 = vpop.f32.mrb[0].mxu0
      %v447 = vadd.f32 0.0, %v446
      %v448 = vpop.f32.mrb[0].mxu0
      %449 = vmatprep.mubr.f32.mxu0 0.0
      %450 = vmatmul.mubr.f32.gmra.mrb[0].mxu0 %v254
      %v451 = vpop.f32.mrb[0].mxu0
      %v452 = vadd.f32 0.0, %v451
      %v453 = vpop.f32.mrb[0].mxu0
      %454 = vmatprep.mubr.f32.mxu0 0.0
      %455 = vmatmul.mubr.f32.gmra.mrb[0].mxu0 %v257
      %v456 = vpop.f32.mrb[0].mxu0
      %v457 = vadd.f32 0.0, %v456
      %v458 = vpop.f32.mrb[0].mxu0
      %459 = vmatprep.mubr.f32.mxu0 0.0
      %460 = vmatmul.mubr.f32.gmra.mrb[0].mxu0 %v260
      %v461 = vpop.f32.mrb[0].mxu0
      %v462 = vadd.f32 0.0, %v461
      %v463 = vpop.f32.mrb[0].mxu0
      %464 = vmatprep.mubr.f32.mxu0 0.0
      %465 = vmatmul.mubr.f32.gmra.mrb[0].mxu0 %v263
      %v466 = vpop.f32.mrb[0].mxu0
      %v467 = vadd.f32 0.0, %v466
      %v468 = vpop.f32.mrb[0].mxu0
      %469 = vmatprep.mubr.f32.mxu0 0.0
      %470 = vmatmul.mubr.f32.gmra.mrb[0].mxu0 %v266
      %v471 = vpop.f32.mrb[0].mxu0
      %v472 = vadd.f32 0.0, %v471
      %v473 = vpop.f32.mrb[0].mxu0
      %474 = vmatprep.mubr.f32.mxu0 0.0
      %475 = vmatmul.mubr.f32.gmra.mrb[0].mxu0 %v269
      %v476 = vpop.f32.mrb[0].mxu0
      %v477 = vadd.f32 0.0, %v476
      %v478 = vpop.f32.mrb[0].mxu0
      %479 = vmatprep.mubr.f32.mxu0 0.0
      %480 = vmatmul.mubr.f32.gmra.mrb[0].mxu0 %v272
      %v481 = vpop.f32.mrb[0].mxu0
      %v482 = vadd.f32 0.0, %v481
      %v483 = vpop.f32.mrb[0].mxu0
      %484 = vmatprep.mubr.f32.mxu0 0.0
      %485 = vmatmul.mubr.f32.gmra.mrb[0].mxu0 %v275
      %v486 = vpop.f32.mrb[0].mxu0
      %v487 = vadd.f32 0.0, %v486
      %v488 = vpop.f32.mrb[0].mxu0
      %489 = vmatprep.mubr.f32.mxu0 0.0
      %490 = vmatmul.mubr.f32.gmra.mrb[0].mxu0 %v278
      %v491 = vpop.f32.mrb[0].mxu0
      %v492 = vadd.f32 0.0, %v491
      %v493 = vpop.f32.mrb[0].mxu0
      %494 = vmatprep.mubr.f32.mxu0 0.0
      %495 = vmatmul.mubr.f32.gmra.mrb[0].mxu0 %v281
      %v496 = vpop.f32.mrb[0].mxu0
      %v497 = vadd.f32 0.0, %v496
      %v498 = vpop.f32.mrb[0].mxu0
      %499 = vmatprep.mubr.f32.mxu0 0.0
      %500 = vmatmul.mubr.f32.gmra.mrb[0].mxu0 %v284
      %v501 = vpop.f32.mrb[0].mxu0
      %v502 = vadd.f32 0.0, %v501
      %v503 = vpop.f32.mrb[0].mxu0
      %504 = vmatprep.mubr.f32.mxu0 0.0
      %505 = vmatmul.mubr.f32.gmra.mrb[0].mxu0 %v287
      %v506 = vpop.f32.mrb[0].mxu0
      %v507 = vadd.f32 0.0, %v506
      %v508 = vpop.f32.mrb[0].mxu0
      %509 = vmatprep.mubr.f32.mxu0 0.0
      %510 = vmatmul.mubr.f32.gmra.mrb[0].mxu0 %v290
      %v511 = vpop.f32.mrb[0].mxu0
      %v512 = vadd.f32 0.0, %v511
      %v513 = vpop.f32.mrb[0].mxu0
      %514 = vmatprep.mubr.f32.mxu0 0.0
      %515 = vmatmul.mubr.f32.gmra.mrb[0].mxu0 %v293
      %v516 = vpop.f32.mrb[0].mxu0
      %v517 = vadd.f32 0.0, %v516
      %v518 = vpop.f32.mrb[0].mxu0
      %519 = vmatprep.mubr.f32.mxu0 0.0
      %520 = vmatmul.mubr.f32.gmra.mrb[0].mxu0 %v296
      %v521 = vpop.f32.mrb[0].mxu0
      %v522 = vadd.f32 0.0, %v521
      %v523 = vpop.f32.mrb[0].mxu0
      %524 = vmatprep.mubr.f32.mxu0 0.0
      %525 = vmatmul.mubr.f32.gmra.mrb[0].mxu0 %v299
      %v526 = vpop.f32.mrb[0].mxu0
      %v527 = vadd.f32 0.0, %v526
      %v528 = vpop.f32.mrb[0].mxu0
      %529 = vdwg.mxu0
      %vm530 = vcmask 72704
      %v531 = vsel %vm530, %v372, 0.0
      %v532 = vsel %vm530, %v377, 0.0
      %v533 = vadd.f32 %v531, %v532
      %v534 = vsel %vm530, %v382, 0.0
      %v535 = vadd.f32 %v533, %v534
      %v536 = vsel %vm530, %v387, 0.0
      %v537 = vadd.f32 %v535, %v536
      %v538 = vsel %vm530, %v392, 0.0
      %v539 = vadd.f32 %v537, %v538
      %v540 = vsel %vm530, %v397, 0.0
      %v541 = vadd.f32 %v539, %v540
      %v542 = vsel %vm530, %v402, 0.0
      %v543 = vadd.f32 %v541, %v542
      %v544 = vsel %vm530, %v407, 0.0
      %v545 = vadd.f32 %v543, %v544
      %v546 = vsel %vm530, %v412, 0.0
      %v547 = vadd.f32 %v545, %v546
      %v548 = vsel %vm530, %v417, 0.0
      %v549 = vadd.f32 %v547, %v548
      %v550 = vsel %vm530, %v422, 0.0
      %v551 = vadd.f32 %v549, %v550
      %v552 = vsel %vm530, %v427, 0.0
      %v553 = vadd.f32 %v551, %v552
      %v554 = vsel %vm530, %v432, 0.0
      %v555 = vadd.f32 %v553, %v554
      %v556 = vsel %vm530, %v437, 0.0
      %v557 = vadd.f32 %v555, %v556
      %v558 = vsel %vm530, %v442, 0.0
      %v559 = vadd.f32 %v557, %v558
      %v560 = vsel %vm530, %v447, 0.0
      %v561 = vadd.f32 %v559, %v560
      %v562 = vsel %vm530, %v452, 0.0
      %v563 = vadd.f32 %v561, %v562
      %v564 = vsel %vm530, %v457, 0.0
      %v565 = vadd.f32 %v563, %v564
      %v566 = vsel %vm530, %v462, 0.0
      %v567 = vadd.f32 %v565, %v566
      %v568 = vsel %vm530, %v467, 0.0
      %v569 = vadd.f32 %v567, %v568
      %v570 = vsel %vm530, %v472, 0.0
      %v571 = vadd.f32 %v569, %v570
      %v572 = vsel %vm530, %v477, 0.0
      %v573 = vadd.f32 %v571, %v572
      %v574 = vsel %vm530, %v482, 0.0
      %v575 = vadd.f32 %v573, %v574
      %v576 = vsel %vm530, %v487, 0.0
      %v577 = vadd.f32 %v575, %v576
      %v578 = vsel %vm530, %v492, 0.0
      %v579 = vadd.f32 %v577, %v578
      %v580 = vsel %vm530, %v497, 0.0
      %v581 = vadd.f32 %v579, %v580
      %v582 = vsel %vm530, %v502, 0.0
      %v583 = vadd.f32 %v581, %v582
      %v584 = vsel %vm530, %v507, 0.0
      %v585 = vadd.f32 %v583, %v584
      %v586 = vsel %vm530, %v512, 0.0
      %v587 = vadd.f32 %v585, %v586
      %v588 = vsel %vm530, %v517, 0.0
      %v589 = vadd.f32 %v587, %v588
      %v590 = vsel %vm530, %v522, 0.0
      %v591 = vadd.f32 %v589, %v590
      %v592 = vsel %vm530, %v527, 0.0
      %v593 = vadd.f32 %v591, %v592
      %v594 = vrot.slane %v593, 4
      %v595 = vadd.f32 %v593, %v594
      %v596 = vrot.slane %v595, 2
      %v597 = vadd.f32 %v595, %v596
      %v598 = vrot.slane %v597, 1
      %v599 = vadd.f32 %v597, %v598
      %v600 = vld [vmem:[%s2] sm:$0x1]
      %v601 = vadd.f32 %v599, %v600
      %vm634 = vcmask 1046528
      %v635 = vrot.slane %v372, 1
      %v636 = vrot.slane %v377, 1
      %v637 = vsel %vm634, %v635, %v636
      %v638 = vrot.slane %v382, 1
      %v639 = vrot.slane %v387, 1
      %v640 = vsel %vm634, %v638, %v639
      %v641 = vrot.slane %v392, 1
      %v642 = vrot.slane %v397, 1
      %v643 = vsel %vm634, %v641, %v642
      %v644 = vrot.slane %v402, 1
      %v645 = vrot.slane %v407, 1
      %v646 = vsel %vm634, %v644, %v645
      %v647 = vrot.slane %v412, 1
      %v648 = vrot.slane %v417, 1
      %v649 = vsel %vm634, %v647, %v648
      %v650 = vrot.slane %v422, 1
      %v651 = vrot.slane %v427, 1
      %v652 = vsel %vm634, %v650, %v651
      %v653 = vrot.slane %v432, 1
      %v654 = vrot.slane %v437, 1
      %v655 = vsel %vm634, %v653, %v654
      %v656 = vrot.slane %v442, 1
      %v657 = vrot.slane %v447, 1
      %v658 = vsel %vm634, %v656, %v657
      %v659 = vrot.slane %v452, 1
      %v660 = vrot.slane %v457, 1
      %v661 = vsel %vm634, %v659, %v660
      %v662 = vrot.slane %v462, 1
      %v663 = vrot.slane %v467, 1
      %v664 = vsel %vm634, %v662, %v663
      %v665 = vrot.slane %v472, 1
      %v666 = vrot.slane %v477, 1
      %v667 = vsel %vm634, %v665, %v666
      %v668 = vrot.slane %v482, 1
      %v669 = vrot.slane %v487, 1
      %v670 = vsel %vm634, %v668, %v669
      %v671 = vrot.slane %v492, 1
      %v672 = vrot.slane %v497, 1
      %v673 = vsel %vm634, %v671, %v672
      %v674 = vrot.slane %v502, 1
      %v675 = vrot.slane %v507, 1
      %v676 = vsel %vm634, %v674, %v675
      %v677 = vrot.slane %v512, 1
      %v678 = vrot.slane %v517, 1
      %v679 = vsel %vm634, %v677, %v678
      %v680 = vrot.slane %v522, 1
      %v681 = vrot.slane %v527, 1
      %v682 = vsel %vm634, %v680, %v681
      %v715 = vadd.f32 %v372, %v637
      %v716 = vadd.f32 %v377, %v636
      %v717 = vadd.f32 %v382, %v640
      %v718 = vadd.f32 %v387, %v639
      %v719 = vadd.f32 %v392, %v643
      %v720 = vadd.f32 %v397, %v642
      %v721 = vadd.f32 %v402, %v646
      %v722 = vadd.f32 %v407, %v645
      %v723 = vadd.f32 %v412, %v649
      %v724 = vadd.f32 %v417, %v648
      %v725 = vadd.f32 %v422, %v652
      %v726 = vadd.f32 %v427, %v651
      %v727 = vadd.f32 %v432, %v655
      %v728 = vadd.f32 %v437, %v654
      %v729 = vadd.f32 %v442, %v658
      %v730 = vadd.f32 %v447, %v657
      %v731 = vadd.f32 %v452, %v661
      %v732 = vadd.f32 %v457, %v660
      %v733 = vadd.f32 %v462, %v664
      %v734 = vadd.f32 %v467, %v663
      %v735 = vadd.f32 %v472, %v667
      %v736 = vadd.f32 %v477, %v666
      %v737 = vadd.f32 %v482, %v670
      %v738 = vadd.f32 %v487, %v669
      %v739 = vadd.f32 %v492, %v673
      %v740 = vadd.f32 %v497, %v672
      %v741 = vadd.f32 %v502, %v676
      %v742 = vadd.f32 %v507, %v675
      %v743 = vadd.f32 %v512, %v679
      %v744 = vadd.f32 %v517, %v678
      %v745 = vadd.f32 %v522, %v682
      %v746 = vadd.f32 %v527, %v681
      %vm747 = vcmask 1045504
      %v748 = vrot.slane %v372, 2
      %v749 = vrot.slane %v377, 2
      %v750 = vsel %vm747, %v748, %v749
      %v751 = vrot.slane %v382, 2
      %v752 = vrot.slane %v387, 2
      %v753 = vsel %vm747, %v751, %v752
      %v754 = vrot.slane %v392, 2
      %v755 = vrot.slane %v397, 2
      %v756 = vsel %vm747, %v754, %v755
      %v757 = vrot.slane %v402, 2
      %v758 = vrot.slane %v407, 2
      %v759 = vsel %vm747, %v757, %v758
      %v760 = vrot.slane %v412, 2
      %v761 = vrot.slane %v417, 2
      %v762 = vsel %vm747, %v760, %v761
      %v763 = vrot.slane %v422, 2
      %v764 = vrot.slane %v427, 2
      %v765 = vsel %vm747, %v763, %v764
      %v766 = vrot.slane %v432, 2
      %v767 = vrot.slane %v437, 2
      %v768 = vsel %vm747, %v766, %v767
      %v769 = vrot.slane %v442, 2
      %v770 = vrot.slane %v447, 2
      %v771 = vsel %vm747, %v769, %v770
      %v772 = vrot.slane %v452, 2
      %v773 = vrot.slane %v457, 2
      %v774 = vsel %vm747, %v772, %v773
      %v775 = vrot.slane %v462, 2
      %v776 = vrot.slane %v467, 2
      %v777 = vsel %vm747, %v775, %v776
      %v778 = vrot.slane %v472, 2
      %v779 = vrot.slane %v477, 2
      %v780 = vsel %vm747, %v778, %v779
      %v781 = vrot.slane %v482, 2
      %v782 = vrot.slane %v487, 2
      %v783 = vsel %vm747, %v781, %v782
      %v784 = vrot.slane %v492, 2
      %v785 = vrot.slane %v497, 2
      %v786 = vsel %vm747, %v784, %v785
      %v787 = vrot.slane %v502, 2
      %v788 = vrot.slane %v507, 2
      %v789 = vsel %vm747, %v787, %v788
      %v790 = vrot.slane %v512, 2
      %v791 = vrot.slane %v517, 2
      %v792 = vsel %vm747, %v790, %v791
      %v793 = vrot.slane %v522, 2
      %v794 = vrot.slane %v527, 2
      %v795 = vsel %vm747, %v793, %v794
      %v828 = vadd.f32 %v715, %v750
      %v829 = vadd.f32 %v716, %v749
      %v830 = vadd.f32 %v717, %v753
      %v831 = vadd.f32 %v718, %v752
      %v832 = vadd.f32 %v719, %v756
      %v833 = vadd.f32 %v720, %v755
      %v834 = vadd.f32 %v721, %v759
      %v835 = vadd.f32 %v722, %v758
      %v836 = vadd.f32 %v723, %v762
      %v837 = vadd.f32 %v724, %v761
      %v838 = vadd.f32 %v725, %v765
      %v839 = vadd.f32 %v726, %v764
      %v840 = vadd.f32 %v727, %v768
      %v841 = vadd.f32 %v728, %v767
      %v842 = vadd.f32 %v729, %v771
      %v843 = vadd.f32 %v730, %v770
      %v844 = vadd.f32 %v731, %v774
      %v845 = vadd.f32 %v732, %v773
      %v846 = vadd.f32 %v733, %v777
      %v847 = vadd.f32 %v734, %v776
      %v848 = vadd.f32 %v735, %v780
      %v849 = vadd.f32 %v736, %v779
      %v850 = vadd.f32 %v737, %v783
      %v851 = vadd.f32 %v738, %v782
      %v852 = vadd.f32 %v739, %v786
      %v853 = vadd.f32 %v740, %v785
      %v854 = vadd.f32 %v741, %v789
      %v855 = vadd.f32 %v742, %v788
      %v856 = vadd.f32 %v743, %v792
      %v857 = vadd.f32 %v744, %v791
      %v858 = vadd.f32 %v745, %v795
      %v859 = vadd.f32 %v746, %v794
      %v860 = vadd.f32 %v828, %v830
      %v861 = vadd.f32 %v829, %v831
      %v862 = vadd.f32 %v830, %v832
      %v863 = vadd.f32 %v831, %v833
      %v864 = vadd.f32 %v832, %v834
      %v865 = vadd.f32 %v833, %v835
      %v866 = vadd.f32 %v834, %v836
      %v867 = vadd.f32 %v835, %v837
      %v868 = vadd.f32 %v836, %v838
      %v869 = vadd.f32 %v837, %v839
      %v870 = vadd.f32 %v838, %v840
      %v871 = vadd.f32 %v839, %v841
      %v872 = vadd.f32 %v840, %v842
      %v873 = vadd.f32 %v841, %v843
      %v874 = vadd.f32 %v842, %v844
      %v875 = vadd.f32 %v843, %v845
      %v876 = vadd.f32 %v844, %v846
      %v877 = vadd.f32 %v845, %v847
      %v878 = vadd.f32 %v846, %v848
      %v879 = vadd.f32 %v847, %v849
      %v880 = vadd.f32 %v848, %v850
      %v881 = vadd.f32 %v849, %v851
      %v882 = vadd.f32 %v850, %v852
      %v883 = vadd.f32 %v851, %v853
      %v884 = vadd.f32 %v852, %v854
      %v885 = vadd.f32 %v853, %v855
      %v886 = vadd.f32 %v854, %v856
      %v887 = vadd.f32 %v855, %v857
      %v888 = vadd.f32 %v860, %v832
      %v889 = vadd.f32 %v861, %v833
      %v890 = vadd.f32 %v862, %v834
      %v891 = vadd.f32 %v863, %v835
      %v892 = vadd.f32 %v864, %v836
      %v893 = vadd.f32 %v865, %v837
      %v894 = vadd.f32 %v866, %v838
      %v895 = vadd.f32 %v867, %v839
      %v896 = vadd.f32 %v868, %v840
      %v897 = vadd.f32 %v869, %v841
      %v898 = vadd.f32 %v870, %v842
      %v899 = vadd.f32 %v871, %v843
      %v900 = vadd.f32 %v872, %v844
      %v901 = vadd.f32 %v873, %v845
      %v902 = vadd.f32 %v874, %v846
      %v903 = vadd.f32 %v875, %v847
      %v904 = vadd.f32 %v876, %v848
      %v905 = vadd.f32 %v877, %v849
      %v906 = vadd.f32 %v878, %v850
      %v907 = vadd.f32 %v879, %v851
      %v908 = vadd.f32 %v880, %v852
      %v909 = vadd.f32 %v881, %v853
      %v910 = vadd.f32 %v882, %v854
      %v911 = vadd.f32 %v883, %v855
      %v912 = vadd.f32 %v884, %v856
      %v913 = vadd.f32 %v885, %v857
      %v914 = vadd.f32 %v886, %v858
      %v915 = vadd.f32 %v887, %v859
      %v916 = vlaneseq
      %v917 = vshrl.u32 %v916, 7
      %v918 = vsub.s32 0, %v917
      %v919 = vrot.slane %v601, %v918
      %v920 = vsub.f32 %v919, %v888
      %v921 = vsub.f32 %v919, %v889
      %v922 = vsub.f32 %v919, %v890
      %v923 = vsub.f32 %v919, %v891
      %v924 = vsub.f32 %v919, %v892
      %v925 = vsub.f32 %v919, %v893
      %v926 = vsub.f32 %v919, %v894
      %v927 = vsub.f32 %v919, %v895
      %v928 = vsub.f32 %v919, %v896
      %v929 = vsub.f32 %v919, %v897
      %v930 = vsub.f32 %v919, %v898
      %v931 = vsub.f32 %v919, %v899
      %v932 = vsub.f32 %v919, %v900
      %v933 = vsub.f32 %v919, %v901
      %v934 = vsub.f32 %v919, %v902
      %v935 = vsub.f32 %v919, %v903
      %v936 = vsub.f32 %v919, %v904
      %v937 = vsub.f32 %v919, %v905
      %v938 = vsub.f32 %v919, %v906
      %v939 = vsub.f32 %v919, %v907
      %v940 = vsub.f32 %v919, %v908
      %v941 = vsub.f32 %v919, %v909
      %v942 = vsub.f32 %v919, %v910
      %v943 = vsub.f32 %v919, %v911
      %v944 = vsub.f32 %v919, %v912
      %v945 = vsub.f32 %v919, %v913
      %v946 = vsub.f32 %v919, %v914
      %v947 = vsub.f32 %v919, %v915
      %v948 = vsel %vm530, %v920, -inf
      %949 = vmax.xlane.f32.xlu0 %v948
      %v950 = vpop.xlane.xlu0 %949
      %vm951 = vcmask 70656
      %v952 = vsel %vm951, %v921, -inf
      %953 = vmax.xlane.f32.xlu0 %v952
      %v954 = vpop.xlane.xlu0 %953
      %v955 = vsel %vm530, %v922, -inf
      %956 = vmax.xlane.f32.xlu0 %v955
      %v957 = vpop.xlane.xlu0 %956
      %v958 = vsel %vm951, %v923, -inf
      %959 = vmax.xlane.f32.xlu0 %v958
      %v960 = vpop.xlane.xlu0 %959
      %v961 = vsel %vm530, %v924, -inf
      %962 = vmax.xlane.f32.xlu0 %v961
      %v963 = vpop.xlane.xlu0 %962
      %v964 = vsel %vm951, %v925, -inf
      %965 = vmax.xlane.f32.xlu0 %v964
      %v966 = vpop.xlane.xlu0 %965
      %v967 = vsel %vm530, %v926, -inf
      %968 = vmax.xlane.f32.xlu0 %v967
      %v969 = vpop.xlane.xlu0 %968
      %v970 = vsel %vm951, %v927, -inf
      %971 = vmax.xlane.f32.xlu0 %v970
      %v972 = vpop.xlane.xlu0 %971
      %v973 = vsel %vm530, %v928, -inf
      %974 = vmax.xlane.f32.xlu0 %v973
      %v975 = vpop.xlane.xlu0 %974
      %v976 = vsel %vm951, %v929, -inf
      %977 = vmax.xlane.f32.xlu0 %v976
      %v978 = vpop.xlane.xlu0 %977
      %v979 = vsel %vm530, %v930, -inf
      %980 = vmax.xlane.f32.xlu0 %v979
      %v981 = vpop.xlane.xlu0 %980
      %v982 = vsel %vm951, %v931, -inf
      %983 = vmax.xlane.f32.xlu0 %v982
      %v984 = vpop.xlane.xlu0 %983
      %v985 = vsel %vm530, %v932, -inf
      %986 = vmax.xlane.f32.xlu0 %v985
      %v987 = vpop.xlane.xlu0 %986
      %v988 = vsel %vm951, %v933, -inf
      %989 = vmax.xlane.f32.xlu0 %v988
      %v990 = vpop.xlane.xlu0 %989
      %v991 = vsel %vm530, %v934, -inf
      %992 = vmax.xlane.f32.xlu0 %v991
      %v993 = vpop.xlane.xlu0 %992
      %v994 = vsel %vm951, %v935, -inf
      %995 = vmax.xlane.f32.xlu0 %v994
      %v996 = vpop.xlane.xlu0 %995
      %v997 = vsel %vm530, %v936, -inf
      %998 = vmax.xlane.f32.xlu0 %v997
      %v999 = vpop.xlane.xlu0 %998
      %v1000 = vsel %vm951, %v937, -inf
      %1001 = vmax.xlane.f32.xlu0 %v1000
      %v1002 = vpop.xlane.xlu0 %1001
      %v1003 = vsel %vm530, %v938, -inf
      %1004 = vmax.xlane.f32.xlu0 %v1003
      %v1005 = vpop.xlane.xlu0 %1004
      %v1006 = vsel %vm951, %v939, -inf
      %1007 = vmax.xlane.f32.xlu0 %v1006
      %v1008 = vpop.xlane.xlu0 %1007
      %v1009 = vsel %vm530, %v940, -inf
      %1010 = vmax.xlane.f32.xlu0 %v1009
      %v1011 = vpop.xlane.xlu0 %1010
      %v1012 = vsel %vm951, %v941, -inf
      %1013 = vmax.xlane.f32.xlu0 %v1012
      %v1014 = vpop.xlane.xlu0 %1013
      %v1015 = vsel %vm530, %v942, -inf
      %1016 = vmax.xlane.f32.xlu0 %v1015
      %v1017 = vpop.xlane.xlu0 %1016
      %v1018 = vsel %vm951, %v943, -inf
      %1019 = vmax.xlane.f32.xlu0 %v1018
      %v1020 = vpop.xlane.xlu0 %1019
      %v1021 = vsel %vm530, %v944, -inf
      %1022 = vmax.xlane.f32.xlu0 %v1021
      %v1023 = vpop.xlane.xlu0 %1022
      %v1024 = vsel %vm951, %v945, -inf
      %1025 = vmax.xlane.f32.xlu0 %v1024
      %v1026 = vpop.xlane.xlu0 %1025
      %v1027 = vsel %vm530, %v946, -inf
      %1028 = vmax.xlane.f32.xlu0 %v1027
      %v1029 = vpop.xlane.xlu0 %1028
      %v1030 = vsel %vm951, %v947, -inf
      %1031 = vmax.xlane.f32.xlu0 %v1030
      %v1032 = vpop.xlane.xlu0 %1031
      %v1033 = vsub.f32 %v920, %v950
      %v1034 = vsub.f32 %v921, %v954
      %v1035 = vsub.f32 %v922, %v957
      %v1036 = vsub.f32 %v923, %v960
      %v1037 = vsub.f32 %v924, %v963
      %v1038 = vsub.f32 %v925, %v966
      %v1039 = vsub.f32 %v926, %v969
      %v1040 = vsub.f32 %v927, %v972
      %v1041 = vsub.f32 %v928, %v975
      %v1042 = vsub.f32 %v929, %v978
      %v1043 = vsub.f32 %v930, %v981
      %v1044 = vsub.f32 %v931, %v984
      %v1045 = vsub.f32 %v932, %v987
      %v1046 = vsub.f32 %v933, %v990
      %v1047 = vsub.f32 %v934, %v993
      %v1048 = vsub.f32 %v935, %v996
      %v1049 = vsub.f32 %v936, %v999
      %v1050 = vsub.f32 %v937, %v1002
      %v1051 = vsub.f32 %v938, %v1005
      %v1052 = vsub.f32 %v939, %v1008
      %v1053 = vsub.f32 %v940, %v1011
      %v1054 = vsub.f32 %v941, %v1014
      %v1055 = vsub.f32 %v942, %v1017
      %v1056 = vsub.f32 %v943, %v1020
      %v1057 = vsub.f32 %v944, %v1023
      %v1058 = vsub.f32 %v945, %v1026
      %v1059 = vsub.f32 %v946, %v1029
      %v1060 = vsub.f32 %v947, %v1032
      %v1061 = vmul.f32 %v1033, 1.442695
      %v1062 = vpow.pop %v1061
      %v1063 = vmul.f32 %v1034, 1.442695
      %v1064 = vpow.pop %v1063
      %v1065 = vmul.f32 %v1035, 1.442695
      %v1066 = vpow.pop %v1065
      %v1067 = vmul.f32 %v1036, 1.442695
      %v1068 = vpow.pop %v1067
      %v1069 = vmul.f32 %v1037, 1.442695
      %v1070 = vpow.pop %v1069
      %v1071 = vmul.f32 %v1038, 1.442695
      %v1072 = vpow.pop %v1071
      %v1073 = vmul.f32 %v1039, 1.442695
      %v1074 = vpow.pop %v1073
      %v1075 = vmul.f32 %v1040, 1.442695
      %v1076 = vpow.pop %v1075
      %v1077 = vmul.f32 %v1041, 1.442695
      %v1078 = vpow.pop %v1077
      %v1079 = vmul.f32 %v1042, 1.442695
      %v1080 = vpow.pop %v1079
      %v1081 = vmul.f32 %v1043, 1.442695
      %v1082 = vpow.pop %v1081
      %v1083 = vmul.f32 %v1044, 1.442695
      %v1084 = vpow.pop %v1083
      %v1085 = vmul.f32 %v1045, 1.442695
      %v1086 = vpow.pop %v1085
      %v1087 = vmul.f32 %v1046, 1.442695
      %v1088 = vpow.pop %v1087
      %v1089 = vmul.f32 %v1047, 1.442695
      %v1090 = vpow.pop %v1089
      %v1091 = vmul.f32 %v1048, 1.442695
      %v1092 = vpow.pop %v1091
      %v1093 = vmul.f32 %v1049, 1.442695
      %v1094 = vpow.pop %v1093
      %v1095 = vmul.f32 %v1050, 1.442695
      %v1096 = vpow.pop %v1095
      %v1097 = vmul.f32 %v1051, 1.442695
      %v1098 = vpow.pop %v1097
      %v1099 = vmul.f32 %v1052, 1.442695
      %v1100 = vpow.pop %v1099
      %v1101 = vmul.f32 %v1053, 1.442695
      %v1102 = vpow.pop %v1101
      %v1103 = vmul.f32 %v1054, 1.442695
      %v1104 = vpow.pop %v1103
      %v1105 = vmul.f32 %v1055, 1.442695
      %v1106 = vpow.pop %v1105
      %v1107 = vmul.f32 %v1056, 1.442695
      %v1108 = vpow.pop %v1107
      %v1109 = vmul.f32 %v1057, 1.442695
      %v1110 = vpow.pop %v1109
      %v1111 = vmul.f32 %v1058, 1.442695
      %v1112 = vpow.pop %v1111
      %v1113 = vmul.f32 %v1059, 1.442695
      %v1114 = vpow.pop %v1113
      %v1115 = vmul.f32 %v1060, 1.442695
      %v1116 = vpow.pop %v1115
      %v1117 = vsel %vm530, %v1062, 0.0
      %1118 = vadd.xlane.f32.xlu0 %v1117
      %v1119 = vpop.xlane.xlu0 %1118
      %v1120 = vsel %vm951, %v1064, 0.0
      %1121 = vadd.xlane.f32.xlu0 %v1120
      %v1122 = vpop.xlane.xlu0 %1121
      %v1123 = vsel %vm530, %v1066, 0.0
      %1124 = vadd.xlane.f32.xlu0 %v1123
      %v1125 = vpop.xlane.xlu0 %1124
      %v1126 = vsel %vm951, %v1068, 0.0
      %1127 = vadd.xlane.f32.xlu0 %v1126
      %v1128 = vpop.xlane.xlu0 %1127
      %v1129 = vsel %vm530, %v1070, 0.0
      %1130 = vadd.xlane.f32.xlu0 %v1129
      %v1131 = vpop.xlane.xlu0 %1130
      %v1132 = vsel %vm951, %v1072, 0.0
      %1133 = vadd.xlane.f32.xlu0 %v1132
      %v1134 = vpop.xlane.xlu0 %1133
      %v1135 = vsel %vm530, %v1074, 0.0
      %1136 = vadd.xlane.f32.xlu0 %v1135
      %v1137 = vpop.xlane.xlu0 %1136
      %v1138 = vsel %vm951, %v1076, 0.0
      %1139 = vadd.xlane.f32.xlu0 %v1138
      %v1140 = vpop.xlane.xlu0 %1139
      %v1141 = vsel %vm530, %v1078, 0.0
      %1142 = vadd.xlane.f32.xlu0 %v1141
      %v1143 = vpop.xlane.xlu0 %1142
      %v1144 = vsel %vm951, %v1080, 0.0
      %1145 = vadd.xlane.f32.xlu0 %v1144
      %v1146 = vpop.xlane.xlu0 %1145
      %v1147 = vsel %vm530, %v1082, 0.0
      %1148 = vadd.xlane.f32.xlu0 %v1147
      %v1149 = vpop.xlane.xlu0 %1148
      %v1150 = vsel %vm951, %v1084, 0.0
      %1151 = vadd.xlane.f32.xlu0 %v1150
      %v1152 = vpop.xlane.xlu0 %1151
      %v1153 = vsel %vm530, %v1086, 0.0
      %1154 = vadd.xlane.f32.xlu0 %v1153
      %v1155 = vpop.xlane.xlu0 %1154
      %v1156 = vsel %vm951, %v1088, 0.0
      %1157 = vadd.xlane.f32.xlu0 %v1156
      %v1158 = vpop.xlane.xlu0 %1157
      %v1159 = vsel %vm530, %v1090, 0.0
      %1160 = vadd.xlane.f32.xlu0 %v1159
      %v1161 = vpop.xlane.xlu0 %1160
      %v1162 = vsel %vm951, %v1092, 0.0
      %1163 = vadd.xlane.f32.xlu0 %v1162
      %v1164 = vpop.xlane.xlu0 %1163
      %v1165 = vsel %vm530, %v1094, 0.0
      %1166 = vadd.xlane.f32.xlu0 %v1165
      %v1167 = vpop.xlane.xlu0 %1166
      %v1168 = vsel %vm951, %v1096, 0.0
      %1169 = vadd.xlane.f32.xlu0 %v1168
      %v1170 = vpop.xlane.xlu0 %1169
      %v1171 = vsel %vm530, %v1098, 0.0
      %1172 = vadd.xlane.f32.xlu0 %v1171
      %v1173 = vpop.xlane.xlu0 %1172
      %v1174 = vsel %vm951, %v1100, 0.0
      %1175 = vadd.xlane.f32.xlu0 %v1174
      %v1176 = vpop.xlane.xlu0 %1175
      %v1177 = vsel %vm530, %v1102, 0.0
      %1178 = vadd.xlane.f32.xlu0 %v1177
      %v1179 = vpop.xlane.xlu0 %1178
      %v1180 = vsel %vm951, %v1104, 0.0
      %1181 = vadd.xlane.f32.xlu0 %v1180
      %v1182 = vpop.xlane.xlu0 %1181
      %v1183 = vsel %vm530, %v1106, 0.0
      %1184 = vadd.xlane.f32.xlu0 %v1183
      %v1185 = vpop.xlane.xlu0 %1184
      %v1186 = vsel %vm951, %v1108, 0.0
      %1187 = vadd.xlane.f32.xlu0 %v1186
      %v1188 = vpop.xlane.xlu0 %1187
      %v1189 = vsel %vm530, %v1110, 0.0
      %1190 = vadd.xlane.f32.xlu0 %v1189
      %v1191 = vpop.xlane.xlu0 %1190
      %v1192 = vsel %vm951, %v1112, 0.0
      %1193 = vadd.xlane.f32.xlu0 %v1192
      %v1194 = vpop.xlane.xlu0 %1193
      %v1195 = vsel %vm530, %v1114, 0.0
      %1196 = vadd.xlane.f32.xlu0 %v1195
      %v1197 = vpop.xlane.xlu0 %1196
      %v1198 = vsel %vm951, %v1116, 0.0
      %1199 = vadd.xlane.f32.xlu0 %v1198
      %v1200 = vpop.xlane.xlu0 %1199
      %v1201 = vrcp.pop %v1119
      %v1202 = vmul.f32 %v1062, %v1201
      %v1203 = vrcp.pop %v1122
      %v1204 = vmul.f32 %v1064, %v1203
      %v1205 = vrcp.pop %v1125
      %v1206 = vmul.f32 %v1066, %v1205
      %v1207 = vrcp.pop %v1128
      %v1208 = vmul.f32 %v1068, %v1207
      %v1209 = vrcp.pop %v1131
      %v1210 = vmul.f32 %v1070, %v1209
      %v1211 = vrcp.pop %v1134
      %v1212 = vmul.f32 %v1072, %v1211
      %v1213 = vrcp.pop %v1137
      %v1214 = vmul.f32 %v1074, %v1213
      %v1215 = vrcp.pop %v1140
      %v1216 = vmul.f32 %v1076, %v1215
      %v1217 = vrcp.pop %v1143
      %v1218 = vmul.f32 %v1078, %v1217
      %v1219 = vrcp.pop %v1146
      %v1220 = vmul.f32 %v1080, %v1219
      %v1221 = vrcp.pop %v1149
      %v1222 = vmul.f32 %v1082, %v1221
      %v1223 = vrcp.pop %v1152
      %v1224 = vmul.f32 %v1084, %v1223
      %v1225 = vrcp.pop %v1155
      %v1226 = vmul.f32 %v1086, %v1225
      %v1227 = vrcp.pop %v1158
      %v1228 = vmul.f32 %v1088, %v1227
      %v1229 = vrcp.pop %v1161
      %v1230 = vmul.f32 %v1090, %v1229
      %v1231 = vrcp.pop %v1164
      %v1232 = vmul.f32 %v1092, %v1231
      %v1233 = vrcp.pop %v1167
      %v1234 = vmul.f32 %v1094, %v1233
      %v1235 = vrcp.pop %v1170
      %v1236 = vmul.f32 %v1096, %v1235
      %v1237 = vrcp.pop %v1173
      %v1238 = vmul.f32 %v1098, %v1237
      %v1239 = vrcp.pop %v1176
      %v1240 = vmul.f32 %v1100, %v1239
      %v1241 = vrcp.pop %v1179
      %v1242 = vmul.f32 %v1102, %v1241
      %v1243 = vrcp.pop %v1182
      %v1244 = vmul.f32 %v1104, %v1243
      %v1245 = vrcp.pop %v1185
      %v1246 = vmul.f32 %v1106, %v1245
      %v1247 = vrcp.pop %v1188
      %v1248 = vmul.f32 %v1108, %v1247
      %v1249 = vrcp.pop %v1191
      %v1250 = vmul.f32 %v1110, %v1249
      %v1251 = vrcp.pop %v1194
      %v1252 = vmul.f32 %v1112, %v1251
      %v1253 = vrcp.pop %v1197
      %v1254 = vmul.f32 %v1114, %v1253
      %v1255 = vrcp.pop %v1200
      %v1256 = vmul.f32 %v1116, %v1255
      %1258 = vset.pattern.permute.xlu0 0
      %1259 = vperm.xlu0 %1258, %v1202
      %v1260 = vpop.permute.xlu0 %1259
      %1263 = vset.pattern.permute.xlu0 0
      %1264 = vperm.xlu0 %1263, %v1204
      %v1265 = vpop.permute.xlu0 %1264
      %1268 = vset.pattern.permute.xlu0 0
      %1269 = vperm.xlu0 %1268, %v1206
      %v1270 = vpop.permute.xlu0 %1269
      %1273 = vset.pattern.permute.xlu0 0
      %1274 = vperm.xlu0 %1273, %v1208
      %v1275 = vpop.permute.xlu0 %1274
      %1278 = vset.pattern.permute.xlu0 0
      %1279 = vperm.xlu0 %1278, %v1210
      %v1280 = vpop.permute.xlu0 %1279
      %1283 = vset.pattern.permute.xlu0 0
      %1284 = vperm.xlu0 %1283, %v1212
      %v1285 = vpop.permute.xlu0 %1284
      %1288 = vset.pattern.permute.xlu0 0
      %1289 = vperm.xlu0 %1288, %v1214
      %v1290 = vpop.permute.xlu0 %1289
      %1293 = vset.pattern.permute.xlu0 0
      %1294 = vperm.xlu0 %1293, %v1216
      %v1295 = vpop.permute.xlu0 %1294
      %1298 = vset.pattern.permute.xlu0 0
      %1299 = vperm.xlu0 %1298, %v1218
      %v1300 = vpop.permute.xlu0 %1299
      %1303 = vset.pattern.permute.xlu0 0
      %1304 = vperm.xlu0 %1303, %v1220
      %v1305 = vpop.permute.xlu0 %1304
      %1308 = vset.pattern.permute.xlu0 0
      %1309 = vperm.xlu0 %1308, %v1222
      %v1310 = vpop.permute.xlu0 %1309
      %1313 = vset.pattern.permute.xlu0 0
      %1314 = vperm.xlu0 %1313, %v1224
      %v1315 = vpop.permute.xlu0 %1314
      %1318 = vset.pattern.permute.xlu0 0
      %1319 = vperm.xlu0 %1318, %v1226
      %v1320 = vpop.permute.xlu0 %1319
      %1323 = vset.pattern.permute.xlu0 0
      %1324 = vperm.xlu0 %1323, %v1228
      %v1325 = vpop.permute.xlu0 %1324
      %1328 = vset.pattern.permute.xlu0 0
      %1329 = vperm.xlu0 %1328, %v1230
      %v1330 = vpop.permute.xlu0 %1329
      %1333 = vset.pattern.permute.xlu0 0
      %1334 = vperm.xlu0 %1333, %v1232
      %v1335 = vpop.permute.xlu0 %1334
      %1338 = vset.pattern.permute.xlu0 0
      %1339 = vperm.xlu0 %1338, %v1234
      %v1340 = vpop.permute.xlu0 %1339
      %1343 = vset.pattern.permute.xlu0 0
      %1344 = vperm.xlu0 %1343, %v1236
      %v1345 = vpop.permute.xlu0 %1344
      %1348 = vset.pattern.permute.xlu0 0
      %1349 = vperm.xlu0 %1348, %v1238
      %v1350 = vpop.permute.xlu0 %1349
      %1353 = vset.pattern.permute.xlu0 0
      %1354 = vperm.xlu0 %1353, %v1240
      %v1355 = vpop.permute.xlu0 %1354
      %1358 = vset.pattern.permute.xlu0 0
      %1359 = vperm.xlu0 %1358, %v1242
      %v1360 = vpop.permute.xlu0 %1359
      %1363 = vset.pattern.permute.xlu0 0
      %1364 = vperm.xlu0 %1363, %v1244
      %v1365 = vpop.permute.xlu0 %1364
      %1368 = vset.pattern.permute.xlu0 0
      %1369 = vperm.xlu0 %1368, %v1246
      %v1370 = vpop.permute.xlu0 %1369
      %1373 = vset.pattern.permute.xlu0 0
      %1374 = vperm.xlu0 %1373, %v1248
      %v1375 = vpop.permute.xlu0 %1374
      %1378 = vset.pattern.permute.xlu0 0
      %1379 = vperm.xlu0 %1378, %v1250
      %v1380 = vpop.permute.xlu0 %1379
      %1383 = vset.pattern.permute.xlu0 0
      %1384 = vperm.xlu0 %1383, %v1252
      %v1385 = vpop.permute.xlu0 %1384
      %1388 = vset.pattern.permute.xlu0 0
      %1389 = vperm.xlu0 %1388, %v1254
      %v1390 = vpop.permute.xlu0 %1389
      %1393 = vset.pattern.permute.xlu0 0
      %1394 = vperm.xlu0 %1393, %v1256
      %v1395 = vpop.permute.xlu0 %1394
      %v1397 = vmul.f32 %v1260, %v171
      %v1398 = vmul.f32 %v1265, %v172
      %v1399 = vmul.f32 %v1270, %v173
      %v1400 = vmul.f32 %v1275, %v174
      %v1401 = vmul.f32 %v1280, %v175
      %v1402 = vmul.f32 %v1285, %v176
      %v1403 = vmul.f32 %v1290, %v177
      %v1404 = vmul.f32 %v1295, %v178
      %v1405 = vmul.f32 %v1300, %v179
      %v1406 = vmul.f32 %v1305, %v180
      %v1407 = vmul.f32 %v1310, %v181
      %v1408 = vmul.f32 %v1315, %v182
      %v1409 = vmul.f32 %v1320, %v183
      %v1410 = vmul.f32 %v1325, %v184
      %v1411 = vmul.f32 %v1330, %v185
      %v1412 = vmul.f32 %v1335, %v186
      %v1413 = vmul.f32 %v1340, %v187
      %v1414 = vmul.f32 %v1345, %v188
      %v1415 = vmul.f32 %v1350, %v189
      %v1416 = vmul.f32 %v1355, %v190
      %v1417 = vmul.f32 %v1360, %v191
      %v1418 = vmul.f32 %v1365, %v192
      %v1419 = vmul.f32 %v1370, %v193
      %v1420 = vmul.f32 %v1375, %v194
      %v1421 = vmul.f32 %v1380, %v195
      %v1422 = vmul.f32 %v1385, %v196
      %v1423 = vmul.f32 %v1390, %v197
      %v1424 = vmul.f32 %v1395, %v198
      %1425 = vset.pattern.permute.xlu0 1
      %1426 = vperm.xlu0 %1425, %v1202
      %v1427 = vpop.permute.xlu0 %1426
      %1429 = vset.pattern.permute.xlu0 1
      %1430 = vperm.xlu0 %1429, %v1204
      %v1431 = vpop.permute.xlu0 %1430
      %1433 = vset.pattern.permute.xlu0 1
      %1434 = vperm.xlu0 %1433, %v1206
      %v1435 = vpop.permute.xlu0 %1434
      %1437 = vset.pattern.permute.xlu0 1
      %1438 = vperm.xlu0 %1437, %v1208
      %v1439 = vpop.permute.xlu0 %1438
      %1441 = vset.pattern.permute.xlu0 1
      %1442 = vperm.xlu0 %1441, %v1210
      %v1443 = vpop.permute.xlu0 %1442
      %1445 = vset.pattern.permute.xlu0 1
      %1446 = vperm.xlu0 %1445, %v1212
      %v1447 = vpop.permute.xlu0 %1446
      %1449 = vset.pattern.permute.xlu0 1
      %1450 = vperm.xlu0 %1449, %v1214
      %v1451 = vpop.permute.xlu0 %1450
      %1453 = vset.pattern.permute.xlu0 1
      %1454 = vperm.xlu0 %1453, %v1216
      %v1455 = vpop.permute.xlu0 %1454
      %1457 = vset.pattern.permute.xlu0 1
      %1458 = vperm.xlu0 %1457, %v1218
      %v1459 = vpop.permute.xlu0 %1458
      %1461 = vset.pattern.permute.xlu0 1
      %1462 = vperm.xlu0 %1461, %v1220
      %v1463 = vpop.permute.xlu0 %1462
      %1465 = vset.pattern.permute.xlu0 1
      %1466 = vperm.xlu0 %1465, %v1222
      %v1467 = vpop.permute.xlu0 %1466
      %1469 = vset.pattern.permute.xlu0 1
      %1470 = vperm.xlu0 %1469, %v1224
      %v1471 = vpop.permute.xlu0 %1470
      %1473 = vset.pattern.permute.xlu0 1
      %1474 = vperm.xlu0 %1473, %v1226
      %v1475 = vpop.permute.xlu0 %1474
      %1477 = vset.pattern.permute.xlu0 1
      %1478 = vperm.xlu0 %1477, %v1228
      %v1479 = vpop.permute.xlu0 %1478
      %1481 = vset.pattern.permute.xlu0 1
      %1482 = vperm.xlu0 %1481, %v1230
      %v1483 = vpop.permute.xlu0 %1482
      %1485 = vset.pattern.permute.xlu0 1
      %1486 = vperm.xlu0 %1485, %v1232
      %v1487 = vpop.permute.xlu0 %1486
      %1489 = vset.pattern.permute.xlu0 1
      %1490 = vperm.xlu0 %1489, %v1234
      %v1491 = vpop.permute.xlu0 %1490
      %1493 = vset.pattern.permute.xlu0 1
      %1494 = vperm.xlu0 %1493, %v1236
      %v1495 = vpop.permute.xlu0 %1494
      %1497 = vset.pattern.permute.xlu0 1
      %1498 = vperm.xlu0 %1497, %v1238
      %v1499 = vpop.permute.xlu0 %1498
      %1501 = vset.pattern.permute.xlu0 1
      %1502 = vperm.xlu0 %1501, %v1240
      %v1503 = vpop.permute.xlu0 %1502
      %1505 = vset.pattern.permute.xlu0 1
      %1506 = vperm.xlu0 %1505, %v1242
      %v1507 = vpop.permute.xlu0 %1506
      %1509 = vset.pattern.permute.xlu0 1
      %1510 = vperm.xlu0 %1509, %v1244
      %v1511 = vpop.permute.xlu0 %1510
      %1513 = vset.pattern.permute.xlu0 1
      %1514 = vperm.xlu0 %1513, %v1246
      %v1515 = vpop.permute.xlu0 %1514
      %1517 = vset.pattern.permute.xlu0 1
      %1518 = vperm.xlu0 %1517, %v1248
      %v1519 = vpop.permute.xlu0 %1518
      %1521 = vset.pattern.permute.xlu0 1
      %1522 = vperm.xlu0 %1521, %v1250
      %v1523 = vpop.permute.xlu0 %1522
      %1525 = vset.pattern.permute.xlu0 1
      %1526 = vperm.xlu0 %1525, %v1252
      %v1527 = vpop.permute.xlu0 %1526
      %1529 = vset.pattern.permute.xlu0 1
      %1530 = vperm.xlu0 %1529, %v1254
      %v1531 = vpop.permute.xlu0 %1530
      %1533 = vset.pattern.permute.xlu0 1
      %1534 = vperm.xlu0 %1533, %v1256
      %v1535 = vpop.permute.xlu0 %1534
      %v1537 = vrot.slane %v171, 1
      %v1538 = vrot.slane %v172, 1
      %v1539 = vsel %vm634, %v1537, %v1538
      %v1540 = vrot.slane %v173, 1
      %v1541 = vrot.slane %v174, 1
      %v1542 = vsel %vm634, %v1540, %v1541
      %v1543 = vrot.slane %v175, 1
      %v1544 = vrot.slane %v176, 1
      %v1545 = vsel %vm634, %v1543, %v1544
      %v1546 = vrot.slane %v177, 1
      %v1547 = vrot.slane %v178, 1
      %v1548 = vsel %vm634, %v1546, %v1547
      %v1549 = vrot.slane %v179, 1
      %v1550 = vrot.slane %v180, 1
      %v1551 = vsel %vm634, %v1549, %v1550
      %v1552 = vrot.slane %v181, 1
      %v1553 = vrot.slane %v182, 1
      %v1554 = vsel %vm634, %v1552, %v1553
      %v1555 = vrot.slane %v183, 1
      %v1556 = vrot.slane %v184, 1
      %v1557 = vsel %vm634, %v1555, %v1556
      %v1558 = vrot.slane %v185, 1
      %v1559 = vrot.slane %v186, 1
      %v1560 = vsel %vm634, %v1558, %v1559
      %v1561 = vrot.slane %v187, 1
      %v1562 = vrot.slane %v188, 1
      %v1563 = vsel %vm634, %v1561, %v1562
      %v1564 = vrot.slane %v189, 1
      %v1565 = vrot.slane %v190, 1
      %v1566 = vsel %vm634, %v1564, %v1565
      %v1567 = vrot.slane %v191, 1
      %v1568 = vrot.slane %v192, 1
      %v1569 = vsel %vm634, %v1567, %v1568
      %v1570 = vrot.slane %v193, 1
      %v1571 = vrot.slane %v194, 1
      %v1572 = vsel %vm634, %v1570, %v1571
      %v1573 = vrot.slane %v195, 1
      %v1574 = vrot.slane %v196, 1
      %v1575 = vsel %vm634, %v1573, %v1574
      %v1576 = vrot.slane %v197, 1
      %v1577 = vrot.slane %v198, 1
      %v1578 = vsel %vm634, %v1576, %v1577
      %v1607 = vmul.f32 %v1427, %v1539
      %v1608 = vmul.f32 %v1431, %v1538
      %v1609 = vmul.f32 %v1435, %v1542
      %v1610 = vmul.f32 %v1439, %v1541
      %v1611 = vmul.f32 %v1443, %v1545
      %v1612 = vmul.f32 %v1447, %v1544
      %v1613 = vmul.f32 %v1451, %v1548
      %v1614 = vmul.f32 %v1455, %v1547
      %v1615 = vmul.f32 %v1459, %v1551
      %v1616 = vmul.f32 %v1463, %v1550
      %v1617 = vmul.f32 %v1467, %v1554
      %v1618 = vmul.f32 %v1471, %v1553
      %v1619 = vmul.f32 %v1475, %v1557
      %v1620 = vmul.f32 %v1479, %v1556
      %v1621 = vmul.f32 %v1483, %v1560
      %v1622 = vmul.f32 %v1487, %v1559
      %v1623 = vmul.f32 %v1491, %v1563
      %v1624 = vmul.f32 %v1495, %v1562
      %v1625 = vmul.f32 %v1499, %v1566
      %v1626 = vmul.f32 %v1503, %v1565
      %v1627 = vmul.f32 %v1507, %v1569
      %v1628 = vmul.f32 %v1511, %v1568
      %v1629 = vmul.f32 %v1515, %v1572
      %v1630 = vmul.f32 %v1519, %v1571
      %v1631 = vmul.f32 %v1523, %v1575
      %v1632 = vmul.f32 %v1527, %v1574
      %v1633 = vmul.f32 %v1531, %v1578
      %v1634 = vmul.f32 %v1535, %v1577
      %v1635 = vadd.f32 %v1397, %v1607
      %v1636 = vadd.f32 %v1398, %v1608
      %v1637 = vadd.f32 %v1399, %v1609
      %v1638 = vadd.f32 %v1400, %v1610
      %v1639 = vadd.f32 %v1401, %v1611
      %v1640 = vadd.f32 %v1402, %v1612
      %v1641 = vadd.f32 %v1403, %v1613
      %v1642 = vadd.f32 %v1404, %v1614
      %v1643 = vadd.f32 %v1405, %v1615
      %v1644 = vadd.f32 %v1406, %v1616
      %v1645 = vadd.f32 %v1407, %v1617
      %v1646 = vadd.f32 %v1408, %v1618
      %v1647 = vadd.f32 %v1409, %v1619
      %v1648 = vadd.f32 %v1410, %v1620
      %v1649 = vadd.f32 %v1411, %v1621
      %v1650 = vadd.f32 %v1412, %v1622
      %v1651 = vadd.f32 %v1413, %v1623
      %v1652 = vadd.f32 %v1414, %v1624
      %v1653 = vadd.f32 %v1415, %v1625
      %v1654 = vadd.f32 %v1416, %v1626
      %v1655 = vadd.f32 %v1417, %v1627
      %v1656 = vadd.f32 %v1418, %v1628
      %v1657 = vadd.f32 %v1419, %v1629
      %v1658 = vadd.f32 %v1420, %v1630
      %v1659 = vadd.f32 %v1421, %v1631
      %v1660 = vadd.f32 %v1422, %v1632
      %v1661 = vadd.f32 %v1423, %v1633
      %v1662 = vadd.f32 %v1424, %v1634
      %1663 = vset.pattern.permute.xlu0 2
      %1664 = vperm.xlu0 %1663, %v1202
      %v1665 = vpop.permute.xlu0 %1664
      %1667 = vset.pattern.permute.xlu0 2
      %1668 = vperm.xlu0 %1667, %v1204
      %v1669 = vpop.permute.xlu0 %1668
      %1671 = vset.pattern.permute.xlu0 2
      %1672 = vperm.xlu0 %1671, %v1206
      %v1673 = vpop.permute.xlu0 %1672
      %1675 = vset.pattern.permute.xlu0 2
      %1676 = vperm.xlu0 %1675, %v1208
      %v1677 = vpop.permute.xlu0 %1676
      %1679 = vset.pattern.permute.xlu0 2
      %1680 = vperm.xlu0 %1679, %v1210
      %v1681 = vpop.permute.xlu0 %1680
      %1683 = vset.pattern.permute.xlu0 2
      %1684 = vperm.xlu0 %1683, %v1212
      %v1685 = vpop.permute.xlu0 %1684
      %1687 = vset.pattern.permute.xlu0 2
      %1688 = vperm.xlu0 %1687, %v1214
      %v1689 = vpop.permute.xlu0 %1688
      %1691 = vset.pattern.permute.xlu0 2
      %1692 = vperm.xlu0 %1691, %v1216
      %v1693 = vpop.permute.xlu0 %1692
      %1695 = vset.pattern.permute.xlu0 2
      %1696 = vperm.xlu0 %1695, %v1218
      %v1697 = vpop.permute.xlu0 %1696
      %1699 = vset.pattern.permute.xlu0 2
      %1700 = vperm.xlu0 %1699, %v1220
      %v1701 = vpop.permute.xlu0 %1700
      %1703 = vset.pattern.permute.xlu0 2
      %1704 = vperm.xlu0 %1703, %v1222
      %v1705 = vpop.permute.xlu0 %1704
      %1707 = vset.pattern.permute.xlu0 2
      %1708 = vperm.xlu0 %1707, %v1224
      %v1709 = vpop.permute.xlu0 %1708
      %1711 = vset.pattern.permute.xlu0 2
      %1712 = vperm.xlu0 %1711, %v1226
      %v1713 = vpop.permute.xlu0 %1712
      %1715 = vset.pattern.permute.xlu0 2
      %1716 = vperm.xlu0 %1715, %v1228
      %v1717 = vpop.permute.xlu0 %1716
      %1719 = vset.pattern.permute.xlu0 2
      %1720 = vperm.xlu0 %1719, %v1230
      %v1721 = vpop.permute.xlu0 %1720
      %1723 = vset.pattern.permute.xlu0 2
      %1724 = vperm.xlu0 %1723, %v1232
      %v1725 = vpop.permute.xlu0 %1724
      %1727 = vset.pattern.permute.xlu0 2
      %1728 = vperm.xlu0 %1727, %v1234
      %v1729 = vpop.permute.xlu0 %1728
      %1731 = vset.pattern.permute.xlu0 2
      %1732 = vperm.xlu0 %1731, %v1236
      %v1733 = vpop.permute.xlu0 %1732
      %1735 = vset.pattern.permute.xlu0 2
      %1736 = vperm.xlu0 %1735, %v1238
      %v1737 = vpop.permute.xlu0 %1736
      %1739 = vset.pattern.permute.xlu0 2
      %1740 = vperm.xlu0 %1739, %v1240
      %v1741 = vpop.permute.xlu0 %1740
      %1743 = vset.pattern.permute.xlu0 2
      %1744 = vperm.xlu0 %1743, %v1242
      %v1745 = vpop.permute.xlu0 %1744
      %1747 = vset.pattern.permute.xlu0 2
      %1748 = vperm.xlu0 %1747, %v1244
      %v1749 = vpop.permute.xlu0 %1748
      %1751 = vset.pattern.permute.xlu0 2
      %1752 = vperm.xlu0 %1751, %v1246
      %v1753 = vpop.permute.xlu0 %1752
      %1755 = vset.pattern.permute.xlu0 2
      %1756 = vperm.xlu0 %1755, %v1248
      %v1757 = vpop.permute.xlu0 %1756
      %1759 = vset.pattern.permute.xlu0 2
      %1760 = vperm.xlu0 %1759, %v1250
      %v1761 = vpop.permute.xlu0 %1760
      %1763 = vset.pattern.permute.xlu0 2
      %1764 = vperm.xlu0 %1763, %v1252
      %v1765 = vpop.permute.xlu0 %1764
      %1767 = vset.pattern.permute.xlu0 2
      %1768 = vperm.xlu0 %1767, %v1254
      %v1769 = vpop.permute.xlu0 %1768
      %1771 = vset.pattern.permute.xlu0 2
      %1772 = vperm.xlu0 %1771, %v1256
      %v1773 = vpop.permute.xlu0 %1772
      %v1775 = vrot.slane %v171, 2
      %v1776 = vrot.slane %v172, 2
      %v1777 = vsel %vm747, %v1775, %v1776
      %v1778 = vrot.slane %v173, 2
      %v1779 = vrot.slane %v174, 2
      %v1780 = vsel %vm747, %v1778, %v1779
      %v1781 = vrot.slane %v175, 2
      %v1782 = vrot.slane %v176, 2
      %v1783 = vsel %vm747, %v1781, %v1782
      %v1784 = vrot.slane %v177, 2
      %v1785 = vrot.slane %v178, 2
      %v1786 = vsel %vm747, %v1784, %v1785
      %v1787 = vrot.slane %v179, 2
      %v1788 = vrot.slane %v180, 2
      %v1789 = vsel %vm747, %v1787, %v1788
      %v1790 = vrot.slane %v181, 2
      %v1791 = vrot.slane %v182, 2
      %v1792 = vsel %vm747, %v1790, %v1791
      %v1793 = vrot.slane %v183, 2
      %v1794 = vrot.slane %v184, 2
      %v1795 = vsel %vm747, %v1793, %v1794
      %v1796 = vrot.slane %v185, 2
      %v1797 = vrot.slane %v186, 2
      %v1798 = vsel %vm747, %v1796, %v1797
      %v1799 = vrot.slane %v187, 2
      %v1800 = vrot.slane %v188, 2
      %v1801 = vsel %vm747, %v1799, %v1800
      %v1802 = vrot.slane %v189, 2
      %v1803 = vrot.slane %v190, 2
      %v1804 = vsel %vm747, %v1802, %v1803
      %v1805 = vrot.slane %v191, 2
      %v1806 = vrot.slane %v192, 2
      %v1807 = vsel %vm747, %v1805, %v1806
      %v1808 = vrot.slane %v193, 2
      %v1809 = vrot.slane %v194, 2
      %v1810 = vsel %vm747, %v1808, %v1809
      %v1811 = vrot.slane %v195, 2
      %v1812 = vrot.slane %v196, 2
      %v1813 = vsel %vm747, %v1811, %v1812
      %v1814 = vrot.slane %v197, 2
      %v1815 = vrot.slane %v198, 2
      %v1816 = vsel %vm747, %v1814, %v1815
      %v1845 = vmul.f32 %v1665, %v1777
      %v1846 = vmul.f32 %v1669, %v1776
      %v1847 = vmul.f32 %v1673, %v1780
      %v1848 = vmul.f32 %v1677, %v1779
      %v1849 = vmul.f32 %v1681, %v1783
      %v1850 = vmul.f32 %v1685, %v1782
      %v1851 = vmul.f32 %v1689, %v1786
      %v1852 = vmul.f32 %v1693, %v1785
      %v1853 = vmul.f32 %v1697, %v1789
      %v1854 = vmul.f32 %v1701, %v1788
      %v1855 = vmul.f32 %v1705, %v1792
      %v1856 = vmul.f32 %v1709, %v1791
      %v1857 = vmul.f32 %v1713, %v1795
      %v1858 = vmul.f32 %v1717, %v1794
      %v1859 = vmul.f32 %v1721, %v1798
      %v1860 = vmul.f32 %v1725, %v1797
      %v1861 = vmul.f32 %v1729, %v1801
      %v1862 = vmul.f32 %v1733, %v1800
      %v1863 = vmul.f32 %v1737, %v1804
      %v1864 = vmul.f32 %v1741, %v1803
      %v1865 = vmul.f32 %v1745, %v1807
      %v1866 = vmul.f32 %v1749, %v1806
      %v1867 = vmul.f32 %v1753, %v1810
      %v1868 = vmul.f32 %v1757, %v1809
      %v1869 = vmul.f32 %v1761, %v1813
      %v1870 = vmul.f32 %v1765, %v1812
      %v1871 = vmul.f32 %v1769, %v1816
      %v1872 = vmul.f32 %v1773, %v1815
      %v1873 = vadd.f32 %v1635, %v1845
      %v1874 = vadd.f32 %v1636, %v1846
      %v1875 = vadd.f32 %v1637, %v1847
      %v1876 = vadd.f32 %v1638, %v1848
      %v1877 = vadd.f32 %v1639, %v1849
      %v1878 = vadd.f32 %v1640, %v1850
      %v1879 = vadd.f32 %v1641, %v1851
      %v1880 = vadd.f32 %v1642, %v1852
      %v1881 = vadd.f32 %v1643, %v1853
      %v1882 = vadd.f32 %v1644, %v1854
      %v1883 = vadd.f32 %v1645, %v1855
      %v1884 = vadd.f32 %v1646, %v1856
      %v1885 = vadd.f32 %v1647, %v1857
      %v1886 = vadd.f32 %v1648, %v1858
      %v1887 = vadd.f32 %v1649, %v1859
      %v1888 = vadd.f32 %v1650, %v1860
      %v1889 = vadd.f32 %v1651, %v1861
      %v1890 = vadd.f32 %v1652, %v1862
      %v1891 = vadd.f32 %v1653, %v1863
      %v1892 = vadd.f32 %v1654, %v1864
      %v1893 = vadd.f32 %v1655, %v1865
      %v1894 = vadd.f32 %v1656, %v1866
      %v1895 = vadd.f32 %v1657, %v1867
      %v1896 = vadd.f32 %v1658, %v1868
      %v1897 = vadd.f32 %v1659, %v1869
      %v1898 = vadd.f32 %v1660, %v1870
      %v1899 = vadd.f32 %v1661, %v1871
      %v1900 = vadd.f32 %v1662, %v1872
      %1901 = vset.pattern.permute.xlu0 3
      %1902 = vperm.xlu0 %1901, %v1202
      %v1903 = vpop.permute.xlu0 %1902
      %1905 = vset.pattern.permute.xlu0 3
      %1906 = vperm.xlu0 %1905, %v1204
      %v1907 = vpop.permute.xlu0 %1906
      %1909 = vset.pattern.permute.xlu0 3
      %1910 = vperm.xlu0 %1909, %v1206
      %v1911 = vpop.permute.xlu0 %1910
      %1913 = vset.pattern.permute.xlu0 3
      %1914 = vperm.xlu0 %1913, %v1208
      %v1915 = vpop.permute.xlu0 %1914
      %1917 = vset.pattern.permute.xlu0 3
      %1918 = vperm.xlu0 %1917, %v1210
      %v1919 = vpop.permute.xlu0 %1918
      %1921 = vset.pattern.permute.xlu0 3
      %1922 = vperm.xlu0 %1921, %v1212
      %v1923 = vpop.permute.xlu0 %1922
      %1925 = vset.pattern.permute.xlu0 3
      %1926 = vperm.xlu0 %1925, %v1214
      %v1927 = vpop.permute.xlu0 %1926
      %1929 = vset.pattern.permute.xlu0 3
      %1930 = vperm.xlu0 %1929, %v1216
      %v1931 = vpop.permute.xlu0 %1930
      %1933 = vset.pattern.permute.xlu0 3
      %1934 = vperm.xlu0 %1933, %v1218
      %v1935 = vpop.permute.xlu0 %1934
      %1937 = vset.pattern.permute.xlu0 3
      %1938 = vperm.xlu0 %1937, %v1220
      %v1939 = vpop.permute.xlu0 %1938
      %1941 = vset.pattern.permute.xlu0 3
      %1942 = vperm.xlu0 %1941, %v1222
      %v1943 = vpop.permute.xlu0 %1942
      %1945 = vset.pattern.permute.xlu0 3
      %1946 = vperm.xlu0 %1945, %v1224
      %v1947 = vpop.permute.xlu0 %1946
      %1949 = vset.pattern.permute.xlu0 3
      %1950 = vperm.xlu0 %1949, %v1226
      %v1951 = vpop.permute.xlu0 %1950
      %1953 = vset.pattern.permute.xlu0 3
      %1954 = vperm.xlu0 %1953, %v1228
      %v1955 = vpop.permute.xlu0 %1954
      %1957 = vset.pattern.permute.xlu0 3
      %1958 = vperm.xlu0 %1957, %v1230
      %v1959 = vpop.permute.xlu0 %1958
      %1961 = vset.pattern.permute.xlu0 3
      %1962 = vperm.xlu0 %1961, %v1232
      %v1963 = vpop.permute.xlu0 %1962
      %1965 = vset.pattern.permute.xlu0 3
      %1966 = vperm.xlu0 %1965, %v1234
      %v1967 = vpop.permute.xlu0 %1966
      %1969 = vset.pattern.permute.xlu0 3
      %1970 = vperm.xlu0 %1969, %v1236
      %v1971 = vpop.permute.xlu0 %1970
      %1973 = vset.pattern.permute.xlu0 3
      %1974 = vperm.xlu0 %1973, %v1238
      %v1975 = vpop.permute.xlu0 %1974
      %1977 = vset.pattern.permute.xlu0 3
      %1978 = vperm.xlu0 %1977, %v1240
      %v1979 = vpop.permute.xlu0 %1978
      %1981 = vset.pattern.permute.xlu0 3
      %1982 = vperm.xlu0 %1981, %v1242
      %v1983 = vpop.permute.xlu0 %1982
      %1985 = vset.pattern.permute.xlu0 3
      %1986 = vperm.xlu0 %1985, %v1244
      %v1987 = vpop.permute.xlu0 %1986
      %1989 = vset.pattern.permute.xlu0 3
      %1990 = vperm.xlu0 %1989, %v1246
      %v1991 = vpop.permute.xlu0 %1990
      %1993 = vset.pattern.permute.xlu0 3
      %1994 = vperm.xlu0 %1993, %v1248
      %v1995 = vpop.permute.xlu0 %1994
      %1997 = vset.pattern.permute.xlu0 3
      %1998 = vperm.xlu0 %1997, %v1250
      %v1999 = vpop.permute.xlu0 %1998
      %2001 = vset.pattern.permute.xlu0 3
      %2002 = vperm.xlu0 %2001, %v1252
      %v2003 = vpop.permute.xlu0 %2002
      %2005 = vset.pattern.permute.xlu0 3
      %2006 = vperm.xlu0 %2005, %v1254
      %v2007 = vpop.permute.xlu0 %2006
      %2009 = vset.pattern.permute.xlu0 3
      %2010 = vperm.xlu0 %2009, %v1256
      %v2011 = vpop.permute.xlu0 %2010
      %v2013 = vmul.f32 %v1903, %v173
      %v2014 = vmul.f32 %v1907, %v174
      %v2015 = vmul.f32 %v1911, %v175
      %v2016 = vmul.f32 %v1915, %v176
      %v2017 = vmul.f32 %v1919, %v177
      %v2018 = vmul.f32 %v1923, %v178
      %v2019 = vmul.f32 %v1927, %v179
      %v2020 = vmul.f32 %v1931, %v180
      %v2021 = vmul.f32 %v1935, %v181
      %v2022 = vmul.f32 %v1939, %v182
      %v2023 = vmul.f32 %v1943, %v183
      %v2024 = vmul.f32 %v1947, %v184
      %v2025 = vmul.f32 %v1951, %v185
      %v2026 = vmul.f32 %v1955, %v186
      %v2027 = vmul.f32 %v1959, %v187
      %v2028 = vmul.f32 %v1963, %v188
      %v2029 = vmul.f32 %v1967, %v189
      %v2030 = vmul.f32 %v1971, %v190
      %v2031 = vmul.f32 %v1975, %v191
      %v2032 = vmul.f32 %v1979, %v192
      %v2033 = vmul.f32 %v1983, %v193
      %v2034 = vmul.f32 %v1987, %v194
      %v2035 = vmul.f32 %v1991, %v195
      %v2036 = vmul.f32 %v1995, %v196
      %v2037 = vmul.f32 %v1999, %v197
      %v2038 = vmul.f32 %v2003, %v198
      %v2039 = vmul.f32 %v2007, %v199
      %v2040 = vmul.f32 %v2011, %v200
      %v2041 = vadd.f32 %v1873, %v2013
      %v2042 = vadd.f32 %v1874, %v2014
      %v2043 = vadd.f32 %v1875, %v2015
      %v2044 = vadd.f32 %v1876, %v2016
      %v2045 = vadd.f32 %v1877, %v2017
      %v2046 = vadd.f32 %v1878, %v2018
      %v2047 = vadd.f32 %v1879, %v2019
      %v2048 = vadd.f32 %v1880, %v2020
      %v2049 = vadd.f32 %v1881, %v2021
      %v2050 = vadd.f32 %v1882, %v2022
      %v2051 = vadd.f32 %v1883, %v2023
      %v2052 = vadd.f32 %v1884, %v2024
      %v2053 = vadd.f32 %v1885, %v2025
      %v2054 = vadd.f32 %v1886, %v2026
      %v2055 = vadd.f32 %v1887, %v2027
      %v2056 = vadd.f32 %v1888, %v2028
      %v2057 = vadd.f32 %v1889, %v2029
      %v2058 = vadd.f32 %v1890, %v2030
      %v2059 = vadd.f32 %v1891, %v2031
      %v2060 = vadd.f32 %v1892, %v2032
      %v2061 = vadd.f32 %v1893, %v2033
      %v2062 = vadd.f32 %v1894, %v2034
      %v2063 = vadd.f32 %v1895, %v2035
      %v2064 = vadd.f32 %v1896, %v2036
      %v2065 = vadd.f32 %v1897, %v2037
      %v2066 = vadd.f32 %v1898, %v2038
      %v2067 = vadd.f32 %v1899, %v2039
      %v2068 = vadd.f32 %v1900, %v2040
      %2069 = vset.pattern.permute.xlu0 4
      %2070 = vperm.xlu0 %2069, %v1202
      %v2071 = vpop.permute.xlu0 %2070
      %2073 = vset.pattern.permute.xlu0 4
      %2074 = vperm.xlu0 %2073, %v1204
      %v2075 = vpop.permute.xlu0 %2074
      %2077 = vset.pattern.permute.xlu0 4
      %2078 = vperm.xlu0 %2077, %v1206
      %v2079 = vpop.permute.xlu0 %2078
      %2081 = vset.pattern.permute.xlu0 4
      %2082 = vperm.xlu0 %2081, %v1208
      %v2083 = vpop.permute.xlu0 %2082
      %2085 = vset.pattern.permute.xlu0 4
      %2086 = vperm.xlu0 %2085, %v1210
      %v2087 = vpop.permute.xlu0 %2086
      %2089 = vset.pattern.permute.xlu0 4
      %2090 = vperm.xlu0 %2089, %v1212
      %v2091 = vpop.permute.xlu0 %2090
      %2093 = vset.pattern.permute.xlu0 4
      %2094 = vperm.xlu0 %2093, %v1214
      %v2095 = vpop.permute.xlu0 %2094
      %2097 = vset.pattern.permute.xlu0 4
      %2098 = vperm.xlu0 %2097, %v1216
      %v2099 = vpop.permute.xlu0 %2098
      %2101 = vset.pattern.permute.xlu0 4
      %2102 = vperm.xlu0 %2101, %v1218
      %v2103 = vpop.permute.xlu0 %2102
      %2105 = vset.pattern.permute.xlu0 4
      %2106 = vperm.xlu0 %2105, %v1220
      %v2107 = vpop.permute.xlu0 %2106
      %2109 = vset.pattern.permute.xlu0 4
      %2110 = vperm.xlu0 %2109, %v1222
      %v2111 = vpop.permute.xlu0 %2110
      %2113 = vset.pattern.permute.xlu0 4
      %2114 = vperm.xlu0 %2113, %v1224
      %v2115 = vpop.permute.xlu0 %2114
      %2117 = vset.pattern.permute.xlu0 4
      %2118 = vperm.xlu0 %2117, %v1226
      %v2119 = vpop.permute.xlu0 %2118
      %2121 = vset.pattern.permute.xlu0 4
      %2122 = vperm.xlu0 %2121, %v1228
      %v2123 = vpop.permute.xlu0 %2122
      %2125 = vset.pattern.permute.xlu0 4
      %2126 = vperm.xlu0 %2125, %v1230
      %v2127 = vpop.permute.xlu0 %2126
      %2129 = vset.pattern.permute.xlu0 4
      %2130 = vperm.xlu0 %2129, %v1232
      %v2131 = vpop.permute.xlu0 %2130
      %2133 = vset.pattern.permute.xlu0 4
      %2134 = vperm.xlu0 %2133, %v1234
      %v2135 = vpop.permute.xlu0 %2134
      %2137 = vset.pattern.permute.xlu0 4
      %2138 = vperm.xlu0 %2137, %v1236
      %v2139 = vpop.permute.xlu0 %2138
      %2141 = vset.pattern.permute.xlu0 4
      %2142 = vperm.xlu0 %2141, %v1238
      %v2143 = vpop.permute.xlu0 %2142
      %2145 = vset.pattern.permute.xlu0 4
      %2146 = vperm.xlu0 %2145, %v1240
      %v2147 = vpop.permute.xlu0 %2146
      %2149 = vset.pattern.permute.xlu0 4
      %2150 = vperm.xlu0 %2149, %v1242
      %v2151 = vpop.permute.xlu0 %2150
      %2153 = vset.pattern.permute.xlu0 4
      %2154 = vperm.xlu0 %2153, %v1244
      %v2155 = vpop.permute.xlu0 %2154
      %2157 = vset.pattern.permute.xlu0 4
      %2158 = vperm.xlu0 %2157, %v1246
      %v2159 = vpop.permute.xlu0 %2158
      %2161 = vset.pattern.permute.xlu0 4
      %2162 = vperm.xlu0 %2161, %v1248
      %v2163 = vpop.permute.xlu0 %2162
      %2165 = vset.pattern.permute.xlu0 4
      %2166 = vperm.xlu0 %2165, %v1250
      %v2167 = vpop.permute.xlu0 %2166
      %2169 = vset.pattern.permute.xlu0 4
      %2170 = vperm.xlu0 %2169, %v1252
      %v2171 = vpop.permute.xlu0 %2170
      %2173 = vset.pattern.permute.xlu0 4
      %2174 = vperm.xlu0 %2173, %v1254
      %v2175 = vpop.permute.xlu0 %2174
      %2177 = vset.pattern.permute.xlu0 4
      %2178 = vperm.xlu0 %2177, %v1256
      %v2179 = vpop.permute.xlu0 %2178
      %v2181 = vrot.slane %v199, 1
      %v2182 = vrot.slane %v200, 1
      %v2183 = vsel %vm634, %v2181, %v2182
      %v2186 = vmul.f32 %v2071, %v1542
      %v2187 = vmul.f32 %v2075, %v1541
      %v2188 = vmul.f32 %v2079, %v1545
      %v2189 = vmul.f32 %v2083, %v1544
      %v2190 = vmul.f32 %v2087, %v1548
      %v2191 = vmul.f32 %v2091, %v1547
      %v2192 = vmul.f32 %v2095, %v1551
      %v2193 = vmul.f32 %v2099, %v1550
      %v2194 = vmul.f32 %v2103, %v1554
      %v2195 = vmul.f32 %v2107, %v1553
      %v2196 = vmul.f32 %v2111, %v1557
      %v2197 = vmul.f32 %v2115, %v1556
      %v2198 = vmul.f32 %v2119, %v1560
      %v2199 = vmul.f32 %v2123, %v1559
      %v2200 = vmul.f32 %v2127, %v1563
      %v2201 = vmul.f32 %v2131, %v1562
      %v2202 = vmul.f32 %v2135, %v1566
      %v2203 = vmul.f32 %v2139, %v1565
      %v2204 = vmul.f32 %v2143, %v1569
      %v2205 = vmul.f32 %v2147, %v1568
      %v2206 = vmul.f32 %v2151, %v1572
      %v2207 = vmul.f32 %v2155, %v1571
      %v2208 = vmul.f32 %v2159, %v1575
      %v2209 = vmul.f32 %v2163, %v1574
      %v2210 = vmul.f32 %v2167, %v1578
      %v2211 = vmul.f32 %v2171, %v1577
      %v2212 = vmul.f32 %v2175, %v2183
      %v2213 = vmul.f32 %v2179, %v2182
      %v2214 = vadd.f32 %v2041, %v2186
      %v2215 = vadd.f32 %v2042, %v2187
      %v2216 = vadd.f32 %v2043, %v2188
      %v2217 = vadd.f32 %v2044, %v2189
      %v2218 = vadd.f32 %v2045, %v2190
      %v2219 = vadd.f32 %v2046, %v2191
      %v2220 = vadd.f32 %v2047, %v2192
      %v2221 = vadd.f32 %v2048, %v2193
      %v2222 = vadd.f32 %v2049, %v2194
      %v2223 = vadd.f32 %v2050, %v2195
      %v2224 = vadd.f32 %v2051, %v2196
      %v2225 = vadd.f32 %v2052, %v2197
      %v2226 = vadd.f32 %v2053, %v2198
      %v2227 = vadd.f32 %v2054, %v2199
      %v2228 = vadd.f32 %v2055, %v2200
      %v2229 = vadd.f32 %v2056, %v2201
      %v2230 = vadd.f32 %v2057, %v2202
      %v2231 = vadd.f32 %v2058, %v2203
      %v2232 = vadd.f32 %v2059, %v2204
      %v2233 = vadd.f32 %v2060, %v2205
      %v2234 = vadd.f32 %v2061, %v2206
      %v2235 = vadd.f32 %v2062, %v2207
      %v2236 = vadd.f32 %v2063, %v2208
      %v2237 = vadd.f32 %v2064, %v2209
      %v2238 = vadd.f32 %v2065, %v2210
      %v2239 = vadd.f32 %v2066, %v2211
      %v2240 = vadd.f32 %v2067, %v2212
      %v2241 = vadd.f32 %v2068, %v2213
      %2242 = vset.pattern.permute.xlu0 5
      %2243 = vperm.xlu0 %2242, %v1202
      %v2244 = vpop.permute.xlu0 %2243
      %2246 = vset.pattern.permute.xlu0 5
      %2247 = vperm.xlu0 %2246, %v1204
      %v2248 = vpop.permute.xlu0 %2247
      %2250 = vset.pattern.permute.xlu0 5
      %2251 = vperm.xlu0 %2250, %v1206
      %v2252 = vpop.permute.xlu0 %2251
      %2254 = vset.pattern.permute.xlu0 5
      %2255 = vperm.xlu0 %2254, %v1208
      %v2256 = vpop.permute.xlu0 %2255
      %2258 = vset.pattern.permute.xlu0 5
      %2259 = vperm.xlu0 %2258, %v1210
      %v2260 = vpop.permute.xlu0 %2259
      %2262 = vset.pattern.permute.xlu0 5
      %2263 = vperm.xlu0 %2262, %v1212
      %v2264 = vpop.permute.xlu0 %2263
      %2266 = vset.pattern.permute.xlu0 5
      %2267 = vperm.xlu0 %2266, %v1214
      %v2268 = vpop.permute.xlu0 %2267
      %2270 = vset.pattern.permute.xlu0 5
      %2271 = vperm.xlu0 %2270, %v1216
      %v2272 = vpop.permute.xlu0 %2271
      %2274 = vset.pattern.permute.xlu0 5
      %2275 = vperm.xlu0 %2274, %v1218
      %v2276 = vpop.permute.xlu0 %2275
      %2278 = vset.pattern.permute.xlu0 5
      %2279 = vperm.xlu0 %2278, %v1220
      %v2280 = vpop.permute.xlu0 %2279
      %2282 = vset.pattern.permute.xlu0 5
      %2283 = vperm.xlu0 %2282, %v1222
      %v2284 = vpop.permute.xlu0 %2283
      %2286 = vset.pattern.permute.xlu0 5
      %2287 = vperm.xlu0 %2286, %v1224
      %v2288 = vpop.permute.xlu0 %2287
      %2290 = vset.pattern.permute.xlu0 5
      %2291 = vperm.xlu0 %2290, %v1226
      %v2292 = vpop.permute.xlu0 %2291
      %2294 = vset.pattern.permute.xlu0 5
      %2295 = vperm.xlu0 %2294, %v1228
      %v2296 = vpop.permute.xlu0 %2295
      %2298 = vset.pattern.permute.xlu0 5
      %2299 = vperm.xlu0 %2298, %v1230
      %v2300 = vpop.permute.xlu0 %2299
      %2302 = vset.pattern.permute.xlu0 5
      %2303 = vperm.xlu0 %2302, %v1232
      %v2304 = vpop.permute.xlu0 %2303
      %2306 = vset.pattern.permute.xlu0 5
      %2307 = vperm.xlu0 %2306, %v1234
      %v2308 = vpop.permute.xlu0 %2307
      %2310 = vset.pattern.permute.xlu0 5
      %2311 = vperm.xlu0 %2310, %v1236
      %v2312 = vpop.permute.xlu0 %2311
      %2314 = vset.pattern.permute.xlu0 5
      %2315 = vperm.xlu0 %2314, %v1238
      %v2316 = vpop.permute.xlu0 %2315
      %2318 = vset.pattern.permute.xlu0 5
      %2319 = vperm.xlu0 %2318, %v1240
      %v2320 = vpop.permute.xlu0 %2319
      %2322 = vset.pattern.permute.xlu0 5
      %2323 = vperm.xlu0 %2322, %v1242
      %v2324 = vpop.permute.xlu0 %2323
      %2326 = vset.pattern.permute.xlu0 5
      %2327 = vperm.xlu0 %2326, %v1244
      %v2328 = vpop.permute.xlu0 %2327
      %2330 = vset.pattern.permute.xlu0 5
      %2331 = vperm.xlu0 %2330, %v1246
      %v2332 = vpop.permute.xlu0 %2331
      %2334 = vset.pattern.permute.xlu0 5
      %2335 = vperm.xlu0 %2334, %v1248
      %v2336 = vpop.permute.xlu0 %2335
      %2338 = vset.pattern.permute.xlu0 5
      %2339 = vperm.xlu0 %2338, %v1250
      %v2340 = vpop.permute.xlu0 %2339
      %2342 = vset.pattern.permute.xlu0 5
      %2343 = vperm.xlu0 %2342, %v1252
      %v2344 = vpop.permute.xlu0 %2343
      %2346 = vset.pattern.permute.xlu0 5
      %2347 = vperm.xlu0 %2346, %v1254
      %v2348 = vpop.permute.xlu0 %2347
      %2350 = vset.pattern.permute.xlu0 5
      %2351 = vperm.xlu0 %2350, %v1256
      %v2352 = vpop.permute.xlu0 %2351
      %v2354 = vrot.slane %v199, 2
      %v2355 = vrot.slane %v200, 2
      %v2356 = vsel %vm747, %v2354, %v2355
      %v2359 = vmul.f32 %v2244, %v1780
      %v2360 = vmul.f32 %v2248, %v1779
      %v2361 = vmul.f32 %v2252, %v1783
      %v2362 = vmul.f32 %v2256, %v1782
      %v2363 = vmul.f32 %v2260, %v1786
      %v2364 = vmul.f32 %v2264, %v1785
      %v2365 = vmul.f32 %v2268, %v1789
      %v2366 = vmul.f32 %v2272, %v1788
      %v2367 = vmul.f32 %v2276, %v1792
      %v2368 = vmul.f32 %v2280, %v1791
      %v2369 = vmul.f32 %v2284, %v1795
      %v2370 = vmul.f32 %v2288, %v1794
      %v2371 = vmul.f32 %v2292, %v1798
      %v2372 = vmul.f32 %v2296, %v1797
      %v2373 = vmul.f32 %v2300, %v1801
      %v2374 = vmul.f32 %v2304, %v1800
      %v2375 = vmul.f32 %v2308, %v1804
      %v2376 = vmul.f32 %v2312, %v1803
      %v2377 = vmul.f32 %v2316, %v1807
      %v2378 = vmul.f32 %v2320, %v1806
      %v2379 = vmul.f32 %v2324, %v1810
      %v2380 = vmul.f32 %v2328, %v1809
      %v2381 = vmul.f32 %v2332, %v1813
      %v2382 = vmul.f32 %v2336, %v1812
      %v2383 = vmul.f32 %v2340, %v1816
      %v2384 = vmul.f32 %v2344, %v1815
      %v2385 = vmul.f32 %v2348, %v2356
      %v2386 = vmul.f32 %v2352, %v2355
      %v2387 = vadd.f32 %v2214, %v2359
      %v2388 = vadd.f32 %v2215, %v2360
      %v2389 = vadd.f32 %v2216, %v2361
      %v2390 = vadd.f32 %v2217, %v2362
      %v2391 = vadd.f32 %v2218, %v2363
      %v2392 = vadd.f32 %v2219, %v2364
      %v2393 = vadd.f32 %v2220, %v2365
      %v2394 = vadd.f32 %v2221, %v2366
      %v2395 = vadd.f32 %v2222, %v2367
      %v2396 = vadd.f32 %v2223, %v2368
      %v2397 = vadd.f32 %v2224, %v2369
      %v2398 = vadd.f32 %v2225, %v2370
      %v2399 = vadd.f32 %v2226, %v2371
      %v2400 = vadd.f32 %v2227, %v2372
      %v2401 = vadd.f32 %v2228, %v2373
      %v2402 = vadd.f32 %v2229, %v2374
      %v2403 = vadd.f32 %v2230, %v2375
      %v2404 = vadd.f32 %v2231, %v2376
      %v2405 = vadd.f32 %v2232, %v2377
      %v2406 = vadd.f32 %v2233, %v2378
      %v2407 = vadd.f32 %v2234, %v2379
      %v2408 = vadd.f32 %v2235, %v2380
      %v2409 = vadd.f32 %v2236, %v2381
      %v2410 = vadd.f32 %v2237, %v2382
      %v2411 = vadd.f32 %v2238, %v2383
      %v2412 = vadd.f32 %v2239, %v2384
      %v2413 = vadd.f32 %v2240, %v2385
      %v2414 = vadd.f32 %v2241, %v2386
      %2415 = vset.pattern.permute.xlu0 6
      %2416 = vperm.xlu0 %2415, %v1202
      %v2417 = vpop.permute.xlu0 %2416
      %2419 = vset.pattern.permute.xlu0 6
      %2420 = vperm.xlu0 %2419, %v1204
      %v2421 = vpop.permute.xlu0 %2420
      %2423 = vset.pattern.permute.xlu0 6
      %2424 = vperm.xlu0 %2423, %v1206
      %v2425 = vpop.permute.xlu0 %2424
      %2427 = vset.pattern.permute.xlu0 6
      %2428 = vperm.xlu0 %2427, %v1208
      %v2429 = vpop.permute.xlu0 %2428
      %2431 = vset.pattern.permute.xlu0 6
      %2432 = vperm.xlu0 %2431, %v1210
      %v2433 = vpop.permute.xlu0 %2432
      %2435 = vset.pattern.permute.xlu0 6
      %2436 = vperm.xlu0 %2435, %v1212
      %v2437 = vpop.permute.xlu0 %2436
      %2439 = vset.pattern.permute.xlu0 6
      %2440 = vperm.xlu0 %2439, %v1214
      %v2441 = vpop.permute.xlu0 %2440
      %2443 = vset.pattern.permute.xlu0 6
      %2444 = vperm.xlu0 %2443, %v1216
      %v2445 = vpop.permute.xlu0 %2444
      %2447 = vset.pattern.permute.xlu0 6
      %2448 = vperm.xlu0 %2447, %v1218
      %v2449 = vpop.permute.xlu0 %2448
      %2451 = vset.pattern.permute.xlu0 6
      %2452 = vperm.xlu0 %2451, %v1220
      %v2453 = vpop.permute.xlu0 %2452
      %2455 = vset.pattern.permute.xlu0 6
      %2456 = vperm.xlu0 %2455, %v1222
      %v2457 = vpop.permute.xlu0 %2456
      %2459 = vset.pattern.permute.xlu0 6
      %2460 = vperm.xlu0 %2459, %v1224
      %v2461 = vpop.permute.xlu0 %2460
      %2463 = vset.pattern.permute.xlu0 6
      %2464 = vperm.xlu0 %2463, %v1226
      %v2465 = vpop.permute.xlu0 %2464
      %2467 = vset.pattern.permute.xlu0 6
      %2468 = vperm.xlu0 %2467, %v1228
      %v2469 = vpop.permute.xlu0 %2468
      %2471 = vset.pattern.permute.xlu0 6
      %2472 = vperm.xlu0 %2471, %v1230
      %v2473 = vpop.permute.xlu0 %2472
      %2475 = vset.pattern.permute.xlu0 6
      %2476 = vperm.xlu0 %2475, %v1232
      %v2477 = vpop.permute.xlu0 %2476
      %2479 = vset.pattern.permute.xlu0 6
      %2480 = vperm.xlu0 %2479, %v1234
      %v2481 = vpop.permute.xlu0 %2480
      %2483 = vset.pattern.permute.xlu0 6
      %2484 = vperm.xlu0 %2483, %v1236
      %v2485 = vpop.permute.xlu0 %2484
      %2487 = vset.pattern.permute.xlu0 6
      %2488 = vperm.xlu0 %2487, %v1238
      %v2489 = vpop.permute.xlu0 %2488
      %2491 = vset.pattern.permute.xlu0 6
      %2492 = vperm.xlu0 %2491, %v1240
      %v2493 = vpop.permute.xlu0 %2492
      %2495 = vset.pattern.permute.xlu0 6
      %2496 = vperm.xlu0 %2495, %v1242
      %v2497 = vpop.permute.xlu0 %2496
      %2499 = vset.pattern.permute.xlu0 6
      %2500 = vperm.xlu0 %2499, %v1244
      %v2501 = vpop.permute.xlu0 %2500
      %2503 = vset.pattern.permute.xlu0 6
      %2504 = vperm.xlu0 %2503, %v1246
      %v2505 = vpop.permute.xlu0 %2504
      %2507 = vset.pattern.permute.xlu0 6
      %2508 = vperm.xlu0 %2507, %v1248
      %v2509 = vpop.permute.xlu0 %2508
      %2511 = vset.pattern.permute.xlu0 6
      %2512 = vperm.xlu0 %2511, %v1250
      %v2513 = vpop.permute.xlu0 %2512
      %2515 = vset.pattern.permute.xlu0 6
      %2516 = vperm.xlu0 %2515, %v1252
      %v2517 = vpop.permute.xlu0 %2516
      %2519 = vset.pattern.permute.xlu0 6
      %2520 = vperm.xlu0 %2519, %v1254
      %v2521 = vpop.permute.xlu0 %2520
      %2523 = vset.pattern.permute.xlu0 6
      %2524 = vperm.xlu0 %2523, %v1256
      %v2525 = vpop.permute.xlu0 %2524
      %v2527 = vmul.f32 %v2417, %v175
      %v2528 = vmul.f32 %v2421, %v176
      %v2529 = vmul.f32 %v2425, %v177
      %v2530 = vmul.f32 %v2429, %v178
      %v2531 = vmul.f32 %v2433, %v179
      %v2532 = vmul.f32 %v2437, %v180
      %v2533 = vmul.f32 %v2441, %v181
      %v2534 = vmul.f32 %v2445, %v182
      %v2535 = vmul.f32 %v2449, %v183
      %v2536 = vmul.f32 %v2453, %v184
      %v2537 = vmul.f32 %v2457, %v185
      %v2538 = vmul.f32 %v2461, %v186
      %v2539 = vmul.f32 %v2465, %v187
      %v2540 = vmul.f32 %v2469, %v188
      %v2541 = vmul.f32 %v2473, %v189
      %v2542 = vmul.f32 %v2477, %v190
      %v2543 = vmul.f32 %v2481, %v191
      %v2544 = vmul.f32 %v2485, %v192
      %v2545 = vmul.f32 %v2489, %v193
      %v2546 = vmul.f32 %v2493, %v194
      %v2547 = vmul.f32 %v2497, %v195
      %v2548 = vmul.f32 %v2501, %v196
      %v2549 = vmul.f32 %v2505, %v197
      %v2550 = vmul.f32 %v2509, %v198
      %v2551 = vmul.f32 %v2513, %v199
      %v2552 = vmul.f32 %v2517, %v200
      %v2553 = vmul.f32 %v2521, %v201
      %v2554 = vmul.f32 %v2525, %v202
      %v2555 = vadd.f32 %v2387, %v2527
      %v2556 = vadd.f32 %v2388, %v2528
      %v2557 = vadd.f32 %v2389, %v2529
      %v2558 = vadd.f32 %v2390, %v2530
      %v2559 = vadd.f32 %v2391, %v2531
      %v2560 = vadd.f32 %v2392, %v2532
      %v2561 = vadd.f32 %v2393, %v2533
      %v2562 = vadd.f32 %v2394, %v2534
      %v2563 = vadd.f32 %v2395, %v2535
      %v2564 = vadd.f32 %v2396, %v2536
      %v2565 = vadd.f32 %v2397, %v2537
      %v2566 = vadd.f32 %v2398, %v2538
      %v2567 = vadd.f32 %v2399, %v2539
      %v2568 = vadd.f32 %v2400, %v2540
      %v2569 = vadd.f32 %v2401, %v2541
      %v2570 = vadd.f32 %v2402, %v2542
      %v2571 = vadd.f32 %v2403, %v2543
      %v2572 = vadd.f32 %v2404, %v2544
      %v2573 = vadd.f32 %v2405, %v2545
      %v2574 = vadd.f32 %v2406, %v2546
      %v2575 = vadd.f32 %v2407, %v2547
      %v2576 = vadd.f32 %v2408, %v2548
      %v2577 = vadd.f32 %v2409, %v2549
      %v2578 = vadd.f32 %v2410, %v2550
      %v2579 = vadd.f32 %v2411, %v2551
      %v2580 = vadd.f32 %v2412, %v2552
      %v2581 = vadd.f32 %v2413, %v2553
      %v2582 = vadd.f32 %v2414, %v2554
      %2583 = vset.pattern.permute.xlu0 7
      %2584 = vperm.xlu0 %2583, %v1202
      %v2585 = vpop.permute.xlu0 %2584
      %2587 = vset.pattern.permute.xlu0 7
      %2588 = vperm.xlu0 %2587, %v1204
      %v2589 = vpop.permute.xlu0 %2588
      %2591 = vset.pattern.permute.xlu0 7
      %2592 = vperm.xlu0 %2591, %v1206
      %v2593 = vpop.permute.xlu0 %2592
      %2595 = vset.pattern.permute.xlu0 7
      %2596 = vperm.xlu0 %2595, %v1208
      %v2597 = vpop.permute.xlu0 %2596
      %2599 = vset.pattern.permute.xlu0 7
      %2600 = vperm.xlu0 %2599, %v1210
      %v2601 = vpop.permute.xlu0 %2600
      %2603 = vset.pattern.permute.xlu0 7
      %2604 = vperm.xlu0 %2603, %v1212
      %v2605 = vpop.permute.xlu0 %2604
      %2607 = vset.pattern.permute.xlu0 7
      %2608 = vperm.xlu0 %2607, %v1214
      %v2609 = vpop.permute.xlu0 %2608
      %2611 = vset.pattern.permute.xlu0 7
      %2612 = vperm.xlu0 %2611, %v1216
      %v2613 = vpop.permute.xlu0 %2612
      %2615 = vset.pattern.permute.xlu0 7
      %2616 = vperm.xlu0 %2615, %v1218
      %v2617 = vpop.permute.xlu0 %2616
      %2619 = vset.pattern.permute.xlu0 7
      %2620 = vperm.xlu0 %2619, %v1220
      %v2621 = vpop.permute.xlu0 %2620
      %2623 = vset.pattern.permute.xlu0 7
      %2624 = vperm.xlu0 %2623, %v1222
      %v2625 = vpop.permute.xlu0 %2624
      %2627 = vset.pattern.permute.xlu0 7
      %2628 = vperm.xlu0 %2627, %v1224
      %v2629 = vpop.permute.xlu0 %2628
      %2631 = vset.pattern.permute.xlu0 7
      %2632 = vperm.xlu0 %2631, %v1226
      %v2633 = vpop.permute.xlu0 %2632
      %2635 = vset.pattern.permute.xlu0 7
      %2636 = vperm.xlu0 %2635, %v1228
      %v2637 = vpop.permute.xlu0 %2636
      %2639 = vset.pattern.permute.xlu0 7
      %2640 = vperm.xlu0 %2639, %v1230
      %v2641 = vpop.permute.xlu0 %2640
      %2643 = vset.pattern.permute.xlu0 7
      %2644 = vperm.xlu0 %2643, %v1232
      %v2645 = vpop.permute.xlu0 %2644
      %2647 = vset.pattern.permute.xlu0 7
      %2648 = vperm.xlu0 %2647, %v1234
      %v2649 = vpop.permute.xlu0 %2648
      %2651 = vset.pattern.permute.xlu0 7
      %2652 = vperm.xlu0 %2651, %v1236
      %v2653 = vpop.permute.xlu0 %2652
      %2655 = vset.pattern.permute.xlu0 7
      %2656 = vperm.xlu0 %2655, %v1238
      %v2657 = vpop.permute.xlu0 %2656
      %2659 = vset.pattern.permute.xlu0 7
      %2660 = vperm.xlu0 %2659, %v1240
      %v2661 = vpop.permute.xlu0 %2660
      %2663 = vset.pattern.permute.xlu0 7
      %2664 = vperm.xlu0 %2663, %v1242
      %v2665 = vpop.permute.xlu0 %2664
      %2667 = vset.pattern.permute.xlu0 7
      %2668 = vperm.xlu0 %2667, %v1244
      %v2669 = vpop.permute.xlu0 %2668
      %2671 = vset.pattern.permute.xlu0 7
      %2672 = vperm.xlu0 %2671, %v1246
      %v2673 = vpop.permute.xlu0 %2672
      %2675 = vset.pattern.permute.xlu0 7
      %2676 = vperm.xlu0 %2675, %v1248
      %v2677 = vpop.permute.xlu0 %2676
      %2679 = vset.pattern.permute.xlu0 7
      %2680 = vperm.xlu0 %2679, %v1250
      %v2681 = vpop.permute.xlu0 %2680
      %2683 = vset.pattern.permute.xlu0 7
      %2684 = vperm.xlu0 %2683, %v1252
      %v2685 = vpop.permute.xlu0 %2684
      %2687 = vset.pattern.permute.xlu0 7
      %2688 = vperm.xlu0 %2687, %v1254
      %v2689 = vpop.permute.xlu0 %2688
      %2691 = vset.pattern.permute.xlu0 7
      %2692 = vperm.xlu0 %2691, %v1256
      %v2693 = vpop.permute.xlu0 %2692
      %v2695 = vrot.slane %v201, 1
      %v2696 = vrot.slane %v202, 1
      %v2697 = vsel %vm634, %v2695, %v2696
      %v2700 = vmul.f32 %v2585, %v1545
      %v2701 = vmul.f32 %v2589, %v1544
      %v2702 = vmul.f32 %v2593, %v1548
      %v2703 = vmul.f32 %v2597, %v1547
      %v2704 = vmul.f32 %v2601, %v1551
      %v2705 = vmul.f32 %v2605, %v1550
      %v2706 = vmul.f32 %v2609, %v1554
      %v2707 = vmul.f32 %v2613, %v1553
      %v2708 = vmul.f32 %v2617, %v1557
      %v2709 = vmul.f32 %v2621, %v1556
      %v2710 = vmul.f32 %v2625, %v1560
      %v2711 = vmul.f32 %v2629, %v1559
      %v2712 = vmul.f32 %v2633, %v1563
      %v2713 = vmul.f32 %v2637, %v1562
      %v2714 = vmul.f32 %v2641, %v1566
      %v2715 = vmul.f32 %v2645, %v1565
      %v2716 = vmul.f32 %v2649, %v1569
      %v2717 = vmul.f32 %v2653, %v1568
      %v2718 = vmul.f32 %v2657, %v1572
      %v2719 = vmul.f32 %v2661, %v1571
      %v2720 = vmul.f32 %v2665, %v1575
      %v2721 = vmul.f32 %v2669, %v1574
      %v2722 = vmul.f32 %v2673, %v1578
      %v2723 = vmul.f32 %v2677, %v1577
      %v2724 = vmul.f32 %v2681, %v2183
      %v2725 = vmul.f32 %v2685, %v2182
      %v2726 = vmul.f32 %v2689, %v2697
      %v2727 = vmul.f32 %v2693, %v2696
      %v2728 = vadd.f32 %v2555, %v2700
      %v2729 = vadd.f32 %v2556, %v2701
      %v2730 = vadd.f32 %v2557, %v2702
      %v2731 = vadd.f32 %v2558, %v2703
      %v2732 = vadd.f32 %v2559, %v2704
      %v2733 = vadd.f32 %v2560, %v2705
      %v2734 = vadd.f32 %v2561, %v2706
      %v2735 = vadd.f32 %v2562, %v2707
      %v2736 = vadd.f32 %v2563, %v2708
      %v2737 = vadd.f32 %v2564, %v2709
      %v2738 = vadd.f32 %v2565, %v2710
      %v2739 = vadd.f32 %v2566, %v2711
      %v2740 = vadd.f32 %v2567, %v2712
      %v2741 = vadd.f32 %v2568, %v2713
      %v2742 = vadd.f32 %v2569, %v2714
      %v2743 = vadd.f32 %v2570, %v2715
      %v2744 = vadd.f32 %v2571, %v2716
      %v2745 = vadd.f32 %v2572, %v2717
      %v2746 = vadd.f32 %v2573, %v2718
      %v2747 = vadd.f32 %v2574, %v2719
      %v2748 = vadd.f32 %v2575, %v2720
      %v2749 = vadd.f32 %v2576, %v2721
      %v2750 = vadd.f32 %v2577, %v2722
      %v2751 = vadd.f32 %v2578, %v2723
      %v2752 = vadd.f32 %v2579, %v2724
      %v2753 = vadd.f32 %v2580, %v2725
      %v2754 = vadd.f32 %v2581, %v2726
      %v2755 = vadd.f32 %v2582, %v2727
      %2756 = vset.pattern.permute.xlu0 8
      %2757 = vperm.xlu0 %2756, %v1202
      %v2758 = vpop.permute.xlu0 %2757
      %2760 = vset.pattern.permute.xlu0 8
      %2761 = vperm.xlu0 %2760, %v1204
      %v2762 = vpop.permute.xlu0 %2761
      %2764 = vset.pattern.permute.xlu0 8
      %2765 = vperm.xlu0 %2764, %v1206
      %v2766 = vpop.permute.xlu0 %2765
      %2768 = vset.pattern.permute.xlu0 8
      %2769 = vperm.xlu0 %2768, %v1208
      %v2770 = vpop.permute.xlu0 %2769
      %2772 = vset.pattern.permute.xlu0 8
      %2773 = vperm.xlu0 %2772, %v1210
      %v2774 = vpop.permute.xlu0 %2773
      %2776 = vset.pattern.permute.xlu0 8
      %2777 = vperm.xlu0 %2776, %v1212
      %v2778 = vpop.permute.xlu0 %2777
      %2780 = vset.pattern.permute.xlu0 8
      %2781 = vperm.xlu0 %2780, %v1214
      %v2782 = vpop.permute.xlu0 %2781
      %2784 = vset.pattern.permute.xlu0 8
      %2785 = vperm.xlu0 %2784, %v1216
      %v2786 = vpop.permute.xlu0 %2785
      %2788 = vset.pattern.permute.xlu0 8
      %2789 = vperm.xlu0 %2788, %v1218
      %v2790 = vpop.permute.xlu0 %2789
      %2792 = vset.pattern.permute.xlu0 8
      %2793 = vperm.xlu0 %2792, %v1220
      %v2794 = vpop.permute.xlu0 %2793
      %2796 = vset.pattern.permute.xlu0 8
      %2797 = vperm.xlu0 %2796, %v1222
      %v2798 = vpop.permute.xlu0 %2797
      %2800 = vset.pattern.permute.xlu0 8
      %2801 = vperm.xlu0 %2800, %v1224
      %v2802 = vpop.permute.xlu0 %2801
      %2804 = vset.pattern.permute.xlu0 8
      %2805 = vperm.xlu0 %2804, %v1226
      %v2806 = vpop.permute.xlu0 %2805
      %2808 = vset.pattern.permute.xlu0 8
      %2809 = vperm.xlu0 %2808, %v1228
      %v2810 = vpop.permute.xlu0 %2809
      %2812 = vset.pattern.permute.xlu0 8
      %2813 = vperm.xlu0 %2812, %v1230
      %v2814 = vpop.permute.xlu0 %2813
      %2816 = vset.pattern.permute.xlu0 8
      %2817 = vperm.xlu0 %2816, %v1232
      %v2818 = vpop.permute.xlu0 %2817
      %2820 = vset.pattern.permute.xlu0 8
      %2821 = vperm.xlu0 %2820, %v1234
      %v2822 = vpop.permute.xlu0 %2821
      %2824 = vset.pattern.permute.xlu0 8
      %2825 = vperm.xlu0 %2824, %v1236
      %v2826 = vpop.permute.xlu0 %2825
      %2828 = vset.pattern.permute.xlu0 8
      %2829 = vperm.xlu0 %2828, %v1238
      %v2830 = vpop.permute.xlu0 %2829
      %2832 = vset.pattern.permute.xlu0 8
      %2833 = vperm.xlu0 %2832, %v1240
      %v2834 = vpop.permute.xlu0 %2833
      %2836 = vset.pattern.permute.xlu0 8
      %2837 = vperm.xlu0 %2836, %v1242
      %v2838 = vpop.permute.xlu0 %2837
      %2840 = vset.pattern.permute.xlu0 8
      %2841 = vperm.xlu0 %2840, %v1244
      %v2842 = vpop.permute.xlu0 %2841
      %2844 = vset.pattern.permute.xlu0 8
      %2845 = vperm.xlu0 %2844, %v1246
      %v2846 = vpop.permute.xlu0 %2845
      %2848 = vset.pattern.permute.xlu0 8
      %2849 = vperm.xlu0 %2848, %v1248
      %v2850 = vpop.permute.xlu0 %2849
      %2852 = vset.pattern.permute.xlu0 8
      %2853 = vperm.xlu0 %2852, %v1250
      %v2854 = vpop.permute.xlu0 %2853
      %2856 = vset.pattern.permute.xlu0 8
      %2857 = vperm.xlu0 %2856, %v1252
      %v2858 = vpop.permute.xlu0 %2857
      %2860 = vset.pattern.permute.xlu0 8
      %2861 = vperm.xlu0 %2860, %v1254
      %v2862 = vpop.permute.xlu0 %2861
      %2864 = vset.pattern.permute.xlu0 8
      %2865 = vperm.xlu0 %2864, %v1256
      %v2866 = vpop.permute.xlu0 %2865
      %v2868 = vrot.slane %v201, 2
      %v2869 = vrot.slane %v202, 2
      %v2870 = vsel %vm747, %v2868, %v2869
      %v2873 = vmul.f32 %v2758, %v1783
      %v2874 = vmul.f32 %v2762, %v1782
      %v2875 = vmul.f32 %v2766, %v1786
      %v2876 = vmul.f32 %v2770, %v1785
      %v2877 = vmul.f32 %v2774, %v1789
      %v2878 = vmul.f32 %v2778, %v1788
      %v2879 = vmul.f32 %v2782, %v1792
      %v2880 = vmul.f32 %v2786, %v1791
      %v2881 = vmul.f32 %v2790, %v1795
      %v2882 = vmul.f32 %v2794, %v1794
      %v2883 = vmul.f32 %v2798, %v1798
      %v2884 = vmul.f32 %v2802, %v1797
      %v2885 = vmul.f32 %v2806, %v1801
      %v2886 = vmul.f32 %v2810, %v1800
      %v2887 = vmul.f32 %v2814, %v1804
      %v2888 = vmul.f32 %v2818, %v1803
      %v2889 = vmul.f32 %v2822, %v1807
      %v2890 = vmul.f32 %v2826, %v1806
      %v2891 = vmul.f32 %v2830, %v1810
      %v2892 = vmul.f32 %v2834, %v1809
      %v2893 = vmul.f32 %v2838, %v1813
      %v2894 = vmul.f32 %v2842, %v1812
      %v2895 = vmul.f32 %v2846, %v1816
      %v2896 = vmul.f32 %v2850, %v1815
      %v2897 = vmul.f32 %v2854, %v2356
      %v2898 = vmul.f32 %v2858, %v2355
      %v2899 = vmul.f32 %v2862, %v2870
      %v2900 = vmul.f32 %v2866, %v2869
      %v2901 = vadd.f32 %v2728, %v2873
      %v2902 = vadd.f32 %v2729, %v2874
      %v2903 = vadd.f32 %v2730, %v2875
      %v2904 = vadd.f32 %v2731, %v2876
      %v2905 = vadd.f32 %v2732, %v2877
      %v2906 = vadd.f32 %v2733, %v2878
      %v2907 = vadd.f32 %v2734, %v2879
      %v2908 = vadd.f32 %v2735, %v2880
      %v2909 = vadd.f32 %v2736, %v2881
      %v2910 = vadd.f32 %v2737, %v2882
      %v2911 = vadd.f32 %v2738, %v2883
      %v2912 = vadd.f32 %v2739, %v2884
      %v2913 = vadd.f32 %v2740, %v2885
      %v2914 = vadd.f32 %v2741, %v2886
      %v2915 = vadd.f32 %v2742, %v2887
      %v2916 = vadd.f32 %v2743, %v2888
      %v2917 = vadd.f32 %v2744, %v2889
      %v2918 = vadd.f32 %v2745, %v2890
      %v2919 = vadd.f32 %v2746, %v2891
      %v2920 = vadd.f32 %v2747, %v2892
      %v2921 = vadd.f32 %v2748, %v2893
      %v2922 = vadd.f32 %v2749, %v2894
      %v2923 = vadd.f32 %v2750, %v2895
      %v2924 = vadd.f32 %v2751, %v2896
      %v2925 = vadd.f32 %v2752, %v2897
      %v2926 = vadd.f32 %v2753, %v2898
      %v2927 = vadd.f32 %v2754, %v2899
      %v2928 = vadd.f32 %v2755, %v2900
      %2929 = vst.msk [vmem:[%s170] sm:$0xff] %vm204, %v2901
      %vm2930 = vcmask 29696
      %2931 = vst.msk [vmem:[%s170 + $0x8] sm:$0x3f] %vm2930, %v2902
      %2932 = vst.msk [vmem:[%s170 + $0x10] sm:$0xff] %vm204, %v2903
      %2933 = vst.msk [vmem:[%s170 + $0x18] sm:$0x3f] %vm2930, %v2904
      %2934 = vst.msk [vmem:[%s170 + $0x20] sm:$0xff] %vm204, %v2905
      %2935 = vst.msk [vmem:[%s170 + $0x28] sm:$0x3f] %vm2930, %v2906
      %2936 = vst.msk [vmem:[%s170 + $0x30] sm:$0xff] %vm204, %v2907
      %2937 = vst.msk [vmem:[%s170 + $0x38] sm:$0x3f] %vm2930, %v2908
      %2938 = vst.msk [vmem:[%s170 + $0x40] sm:$0xff] %vm204, %v2909
      %2939 = vst.msk [vmem:[%s170 + $0x48] sm:$0x3f] %vm2930, %v2910
      %2940 = vst.msk [vmem:[%s170 + $0x50] sm:$0xff] %vm204, %v2911
      %2941 = vst.msk [vmem:[%s170 + $0x58] sm:$0x3f] %vm2930, %v2912
      %2942 = vst.msk [vmem:[%s170 + $0x60] sm:$0xff] %vm204, %v2913
      %2943 = vst.msk [vmem:[%s170 + $0x68] sm:$0x3f] %vm2930, %v2914
      %2944 = vst.msk [vmem:[%s170 + $0x70] sm:$0xff] %vm204, %v2915
      %2945 = vst.msk [vmem:[%s170 + $0x78] sm:$0x3f] %vm2930, %v2916
      %2946 = vst.msk [vmem:[%s170 + $0x80] sm:$0xff] %vm204, %v2917
      %2947 = vst.msk [vmem:[%s170 + $0x88] sm:$0x3f] %vm2930, %v2918
      %2948 = vst.msk [vmem:[%s170 + $0x90] sm:$0xff] %vm204, %v2919
      %2949 = vst.msk [vmem:[%s170 + $0x98] sm:$0x3f] %vm2930, %v2920
      %2950 = vst.msk [vmem:[%s170 + $0xa0] sm:$0xff] %vm204, %v2921
      %2951 = vst.msk [vmem:[%s170 + $0xa8] sm:$0x3f] %vm2930, %v2922
      %2952 = vst.msk [vmem:[%s170 + $0xb0] sm:$0xff] %vm204, %v2923
      %2953 = vst.msk [vmem:[%s170 + $0xb8] sm:$0x3f] %vm2930, %v2924
      %2954 = vst.msk [vmem:[%s170 + $0xc0] sm:$0xff] %vm204, %v2925
      %2955 = vst.msk [vmem:[%s170 + $0xc8] sm:$0x3f] %vm2930, %v2926
      %2956 = vst.msk [vmem:[%s170 + $0xd0] sm:$0xff] %vm204, %v2927
      %2957 = vst.msk [vmem:[%s170 + $0xd8] sm:$0x3f] %vm2930, %v2928
      %p2958 = scmp.lt.s32.totalorder %s14, 1
      %s2959 = scalar_select %p2958, %s14, 1
      %s2960 = smul.addr %s2959, 28
      %s2961 = smul.addr %s2960, 8
      %s2962 = scalar_lea.vmem %s3, %s2961
      // Predicated region
      $region33: #{conv_self_attention_fwd.1} parent=31 // pred_check
        %p2963 = pneg %p100
      $region34: #{conv_self_attention_fwd.1} parent=31 // pred_check_branch
        %2965 = sbr.rel (%p2963) target = $region36
      $region35: #{conv_self_attention_fwd.1} parent=31 // pred_region
        _
      $region36: #{conv_self_attention_fwd.1} parent=31 // pred_fallthru
        _
    $region32: #{conv_self_attention_fwd.1} parent=5 // pred_fallthru
      _
    %p2966 = scmp.le.s32.totalorder 2, %s9
    // Predicated region
    $region37: #{conv_self_attention_fwd.1} parent=5 // pred_check
      %p2967 = pneg %p2966
    $region38: #{conv_self_attention_fwd.1} parent=5 // pred_check_branch
      %2969 = sbr.rel (%p2967) target = $region40
    $region39: #{conv_self_attention_fwd.1} parent=5 // pred_region
      %s2970 = ssub.s32 %s9, 2
      // Predicated region
      $region41: #{conv_self_attention_fwd.1} parent=39 // pred_check
        %p2971 = pneg %p106
      $region42: #{conv_self_attention_fwd.1} parent=39 // pred_check_branch
        %2973 = sbr.rel (%p2971) target = $region44
      $region43: #{conv_self_attention_fwd.1} parent=39 // pred_region
        %p2974 = scmp.lt.s32.totalorder %s15, 1
        %s2975 = scalar_select %p2974, %s15, 1
        %s2976 = smul.addr %s2975, 28
        %s2977 = smul.addr %s2976, 8
        %s2978 = scalar_lea.vmem %s3, %s2977
      $region44: #{conv_self_attention_fwd.1} parent=39 // pred_fallthru
        _
    $region40: #{conv_self_attention_fwd.1} parent=5 // pred_fallthru
      _
  $region6: #{conv_self_attention_fwd.1} parent=0 // loop_footer
    %s13 = sadd.s32 1, %s9
  $region7: #{conv_self_attention_fwd.1} parent=0 // loop_footer_branch
    %8 = sbr.rel target = $region3
  $region8: #{conv_self_attention_fwd.1} parent=0 // loop_exit
    _

</llo_original>
